<compile_context>
chip_gen: v6e
topology: v6e:2x2x1
jax: 0.10.0
libtpu: 0.0.40
codegen_flags: <defaults>
</compile_context>

<pallas_src>
import functools

import jax
import jax.numpy as jnp
from jax.experimental import pallas as pl
from jax.experimental.pallas import tpu as pltpu


# ----------------------------------------------------------------------------
# Fused Pallas kernel (one batch element per grid step)
# ----------------------------------------------------------------------------

def _sba_kernel(lx_ref, hx_ref, wl_ref, wh_ref, kh2l_ref, kl2h_ref,
                w3_ref, w1_ref, mask_ref, out_ref, *, Ch, Hl, Wl):
    HWl = Hl * Wl

    lx = lx_ref[0]                                   # (Cin, HWl)
    hx = hx_ref[0]                                   # (Cin, HWh)
    HWh = hx.shape[1]

    ones_l = jnp.ones((1, HWl), jnp.float32)
    ones_h = jnp.ones((1, HWh), jnp.float32)

    # --- fc + (d_in conv1x1 + BN) in a single stacked matmul per branch --------
    # rows [:Ch]  -> pre-sigmoid fc output t
    # rows [Ch:]  -> bn_scale*(d_w @ t) + bn_bias   (bias via the appended ones row)
    tL = jnp.dot(wl_ref[...], jnp.concatenate([lx, ones_l], axis=0),
                 preferred_element_type=jnp.float32)          # (2Ch, HWl)
    tH = jnp.dot(wh_ref[...], jnp.concatenate([hx, ones_h], axis=0),
                 preferred_element_type=jnp.float32)          # (2Ch, HWh)

    gL = jax.nn.sigmoid(tL[:Ch])                              # (Ch, HWl)
    dL = jnp.maximum(tL[Ch:], 0.0)                            # (Ch, HWl)
    gH = jax.nn.sigmoid(tH[:Ch])                              # (Ch, HWh)
    dH = jnp.maximum(tH[Ch:], 0.0)                            # (Ch, HWh)

    # --- gated cross-resolution fusion (resize = one Kronecker matmul) ---------
    upH = jnp.dot(gH * dH, kh2l_ref[...],
                  preferred_element_type=jnp.float32)         # (Ch, HWl)
    L2 = dL + dL * gL + (1.0 - gL) * upH                      # (Ch, HWl)

    upL = jnp.dot(gL * L2, kl2h_ref[...],
                  preferred_element_type=jnp.float32)         # (Ch, HWh)
    H2 = dH + dH * gH + (1.0 - gH) * upL                      # (Ch, HWh)

    H3 = jnp.dot(H2, kh2l_ref[...],
                 preferred_element_type=jnp.float32)          # (Ch, HWl)

    # torch.cat([H, L], dim=1)
    cat = jnp.concatenate([H3, L2], axis=0)                   # (Cin, HWl)
    Cin = 2 * Ch

    # --- 3x3 conv: in-kernel im2col via zero-pad + 9 static shifts + masks -----
    pad = Wl + 1
    zpad = jnp.zeros((Cin, pad), jnp.float32)
    catp = jnp.concatenate([zpad, cat, zpad], axis=1)         # (Cin, HWl + 2*pad)
    masks = mask_ref[...]                                      # (9, HWl)

    taps = []
    t = 0
    for dy in range(3):
        for dx in range(3):
            off = (dy - 1) * Wl + (dx - 1)
            shifted = catp[:, pad + off: pad + off + HWl]      # (Cin, HWl)
            taps.append(shifted * masks[t:t + 1, :])
            t += 1
    taps.append(ones_l)                                        # bias row for bn3
    x9 = jnp.concatenate(taps, axis=0)                         # (9*Cin + 1, HWl)

    y = jnp.maximum(jnp.dot(w3_ref[...], x9,
                            preferred_element_type=jnp.float32), 0.0)  # (Cin, HWl)
    out_ref[0] = jnp.dot(w1_ref[...], y,
                         preferred_element_type=jnp.float32)           # (Cout, HWl)


# ----------------------------------------------------------------------------
# Host-side helpers (parameter / matrix preparation, plain JAX)
# ----------------------------------------------------------------------------

def bilinear_matrix(out_size, in_size):
    """PyTorch F.interpolate(mode='bilinear', align_corners=False) as a matrix."""
    i = jnp.arange(out_size, dtype=jnp.float32)
    src = jnp.maximum((i + 0.5) * (in_size / out_size) - 0.5, 0.0)
    i0 = jnp.clip(jnp.floor(src), 0, in_size - 1).astype(jnp.int32)
    i1 = jnp.minimum(i0 + 1, in_size - 1)
    w1 = src - i0.astype(jnp.float32)
    w0 = 1.0 - w1
    rows = jnp.arange(out_size)
    M = jnp.zeros((out_size, in_size), jnp.float32)
    M = M.at[rows, i0].add(w0)
    M = M.at[rows, i1].add(w1)
    return M


def resize_matrix(Hs, Ws, Ht, Wt):
    """Flattened resize:  up_flat (1, Ht*Wt) = x_flat (1, Hs*Ws) @ K."""
    R = bilinear_matrix(Ht, Hs)                        # (Ht, Hs)
    C = bilinear_matrix(Wt, Ws)                        # (Wt, Ws)
    return jnp.einsum('ia,jb->abij', R, C).reshape(Hs * Ws, Ht * Wt)


def conv_masks(Hl, Wl):
    """Validity masks (9, Hl*Wl) for the 9 taps of a zero-padded 3x3 conv."""
    p = jnp.arange(Hl * Wl)
    y, x = p // Wl, p % Wl
    rows = []
    for dy in range(3):
        for dx in range(3):
            yy, xx = y + dy - 1, x + dx - 1
            rows.append(((yy >= 0) & (yy < Hl) & (xx >= 0) & (xx < Wl))
                        .astype(jnp.float32))
    return jnp.stack(rows)                             # (9, Hl*Wl)


def fold_bn(gamma, beta, mean, var, eps=1e-5):
    scale = gamma / jnp.sqrt(var + eps)
    bias = beta - mean * scale
    return scale, bias


def make_params(key, input_dim=8, output_dim=8):
    Ch = input_dim // 2
    ks = jax.random.split(key, 9)

    def nrm(k, shape, s):
        return jax.random.normal(k, shape, jnp.float32) * s

    def bn(k, C):
        k1, k2, k3, k4 = jax.random.split(k, 4)
        gamma = 1.0 + 0.1 * jax.random.normal(k1, (C,), jnp.float32)
        beta = 0.1 * jax.random.normal(k2, (C,), jnp.float32)
        mean = 0.1 * jax.random.normal(k3, (C,), jnp.float32)
        var = jnp.abs(jax.random.normal(k4, (C,), jnp.float32)) * 0.5 + 0.5
        return fold_bn(gamma, beta, mean, var)

    d1_scale, d1_bias = bn(ks[4], Ch)
    d2_scale, d2_bias = bn(ks[5], Ch)
    bn3_scale, bn3_bias = bn(ks[7], input_dim)
    return dict(
        fc1_w=nrm(ks[0], (Ch, input_dim), 0.3),
        fc2_w=nrm(ks[1], (Ch, input_dim), 0.3),
        d1_w=nrm(ks[2], (Ch, Ch), 0.3),
        d2_w=nrm(ks[3], (Ch, Ch), 0.3),
        d1_scale=d1_scale, d1_bias=d1_bias,
        d2_scale=d2_scale, d2_bias=d2_bias,
        w3=nrm(ks[6], (input_dim, input_dim, 3, 3), 0.2),
        bn3_scale=bn3_scale, bn3_bias=bn3_bias,
        w1=nrm(ks[8], (output_dim, input_dim), 0.3),
    )


# ----------------------------------------------------------------------------
# SBA forward (single fused pallas_call)
# ----------------------------------------------------------------------------

@jax.jit
def sba_forward(H_feat, L_feat, params):
    B, Cin, Hh, Wh = H_feat.shape
    _, _, Hl, Wl = L_feat.shape
    Ch = Cin // 2
    Cout = params['w1'].shape[0]
    HWl, HWh = Hl * Wl, Hh * Wh

    Lx = L_feat.reshape(B, Cin, HWl)
    Hx = H_feat.reshape(B, Cin, HWh)

    # Stacked branch weight: [fc_w, 0 ; bn_scale*(d_w@fc_w), bn_bias]  -> (2Ch, Cin+1)
    def stack_branch(fc_w, d_w, scale, bias):
        top = jnp.concatenate([fc_w, jnp.zeros((Ch, 1), jnp.float32)], axis=1)
        bot = jnp.concatenate([scale[:, None] * (d_w @ fc_w), bias[:, None]], axis=1)
        return jnp.concatenate([top, bot], axis=0)

    WL = stack_branch(params['fc1_w'], params['d1_w'],
                      params['d1_scale'], params['d1_bias'])
    WH = stack_branch(params['fc2_w'], params['d2_w'],
                      params['d2_scale'], params['d2_bias'])

    # Kronecker resize matrices (PyTorch align_corners=False bilinear)
    Kh2l = resize_matrix(Hh, Wh, Hl, Wl)               # (HWh, HWl)
    Kl2h = resize_matrix(Hl, Wl, Hh, Wh)               # (HWl, HWh)

    # 3x3 conv weight with BN scale folded; BN bias as extra column.
    w3s = params['bn3_scale'][:, None, None, None] * params['w3']   # (Cin, Cin, 3, 3)
    W3f = jnp.concatenate(
        [w3s.transpose(0, 2, 3, 1).reshape(Cin, 9 * Cin),
         params['bn3_bias'][:, None]], axis=1)                      # (Cin, 9*Cin+1)

    masks = conv_masks(Hl, Wl)                                      # (9, HWl)
    W1 = params['w1']                                               # (Cout, Cin)

    kernel = functools.partial(_sba_kernel, Ch=Ch, Hl=Hl, Wl=Wl)
    out = pl.pallas_call(
        kernel,
        out_shape=jax.ShapeDtypeStruct((B, Cout, HWl), jnp.float32),
        grid=(B,),
        in_specs=[
            pl.BlockSpec((1, Cin, HWl), lambda b: (b, 0, 0)),       # L activations
            pl.BlockSpec((1, Cin, HWh), lambda b: (b, 0, 0)),       # H activations
            pl.BlockSpec((2 * Ch, Cin + 1), lambda b: (0, 0)),      # WL
            pl.BlockSpec((2 * Ch, Cin + 1), lambda b: (0, 0)),      # WH
            pl.BlockSpec((HWh, HWl), lambda b: (0, 0)),             # Kh2l
            pl.BlockSpec((HWl, HWh), lambda b: (0, 0)),             # Kl2h
            pl.BlockSpec((Cin, 9 * Cin + 1), lambda b: (0, 0)),     # W3f
            pl.BlockSpec((Cout, Cin), lambda b: (0, 0)),            # W1
            pl.BlockSpec((9, HWl), lambda b: (0, 0)),               # conv masks
        ],
        out_specs=pl.BlockSpec((1, Cout, HWl), lambda b: (b, 0, 0)),
        compiler_params=pltpu.CompilerParams(
            dimension_semantics=("parallel",)),                     # v7x: 2 TCs over B
    )(Lx, Hx, WL, WH, Kh2l, Kl2h, W3f, W1, masks)

    return out.reshape(B, Cout, Hl, Wl)


# ----------------------------------------------------------------------------
# Pure-JAX reference (independent path: lax.conv + einsum resize)
# ----------------------------------------------------------------------------

def sba_reference(H_feat, L_feat, p):
    def conv1x1(x, w):
        return jax.lax.conv_general_dilated(
            x, w[:, :, None, None], (1, 1), 'VALID',
            dimension_numbers=('NCHW', 'OIHW', 'NCHW'))

    def bn_relu(x, scale, bias):
        return jnp.maximum(
            x * scale[None, :, None, None] + bias[None, :, None, None], 0.0)

    def up(x, out_hw):
        Rh = bilinear_matrix(out_hw[0], x.shape[2])
        Rw = bilinear_matrix(out_hw[1], x.shape[3])
        return jnp.einsum('oh,bchw,nw->bcon', Rh, x, Rw)

    Hl, Wl = L_feat.shape[2:]
    Hh, Wh = H_feat.shape[2:]

    tL = conv1x1(L_feat, p['fc1_w'])
    tH = conv1x1(H_feat, p['fc2_w'])
    gL = jax.nn.sigmoid(tL)
    gH = jax.nn.sigmoid(tH)
    dL = bn_relu(conv1x1(tL, p['d1_w']), p['d1_scale'], p['d1_bias'])
    dH = bn_relu(conv1x1(tH, p['d2_w']), p['d2_scale'], p['d2_bias'])

    L2 = dL + dL * gL + (1.0 - gL) * up(gH * dH, (Hl, Wl))
    H2 = dH + dH * gH + (1.0 - gH) * up(gL * L2, (Hh, Wh))
    H3 = up(H2, (Hl, Wl))

    cat = jnp.concatenate([H3, L2], axis=1)
    y = jax.lax.conv_general_dilated(
        cat, p['w3'], (1, 1), ((1, 1), (1, 1)),
        dimension_numbers=('NCHW', 'OIHW', 'NCHW'))
    y = bn_relu(y, p['bn3_scale'], p['bn3_bias'])
    return conv1x1(y, p['w1'])


# ----------------------------------------------------------------------------
# Main
# ----------------------------------------------------------------------------

if __name__ == "__main__":
    input_dim = 8   # must be even (fc reduces to input_dim // 2)
    output_dim = 8
    B = 2
    Hl = Wl = 16    # low-level feature spatial (larger)
    Hh = Wh = 8     # high-level feature spatial (smaller)

    key = jax.random.PRNGKey(0)
    k_p, k_h, k_l = jax.random.split(key, 3)
    params = make_params(k_p, input_dim, output_dim)

    H_feat = jax.random.normal(k_h, (B, input_dim, Hh, Wh), jnp.float32)
    L_feat = jax.random.normal(k_l, (B, input_dim, Hl, Wl), jnp.float32)

    out = jax.block_until_ready(sba_forward(H_feat, L_feat, params))
    ref = jax.block_until_ready(sba_reference(H_feat, L_feat, params))

    assert out.shape == (B, output_dim, Hl, Wl), out.shape
    assert jnp.allclose(out, ref, rtol=2e-2, atol=2e-2), (
        float(jnp.max(jnp.abs(out - ref))))

    print("KERNEL_OK")
</pallas_src>

<mosaic_0001>
module attributes {stable_mosaic.version = 11 : i64} {
  func.func private @main(%arg0: i32) attributes {dimension_semantics = [#tpu.dimension_semantics<core_parallel>], iteration_bounds = array<i64: 2>, tpu.core_type = #tpu.core_type<sc_scalar_subcore>, window_params = []} {
    return
  }
}

module attributes {stable_mosaic.version = 11 : i64} {
  func.func private @main(%arg0: i32) attributes {dimension_semantics = [#tpu.dimension_semantics<core_parallel>], iteration_bounds = array<i64: 2>, tpu.core_type = #tpu.core_type<sc_scalar_subcore>, window_params = []} {
    return
  }
}

module attributes {stable_mosaic.version = 11 : i64} {
  func.func @_sba_kernel(%arg0: i32, %arg1: memref<1x8x256xf32, #tpu.memory_space<vmem>>, %arg2: memref<1x8x64xf32, #tpu.memory_space<vmem>>, %arg3: memref<8x9xf32, #tpu.memory_space<vmem>>, %arg4: memref<8x9xf32, #tpu.memory_space<vmem>>, %arg5: memref<64x256xf32, #tpu.memory_space<vmem>>, %arg6: memref<256x64xf32, #tpu.memory_space<vmem>>, %arg7: memref<8x73xf32, #tpu.memory_space<vmem>>, %arg8: memref<8x8xf32, #tpu.memory_space<vmem>>, %arg9: memref<9x256xf32, #tpu.memory_space<vmem>>, %arg10: memref<1x8x256xf32, #tpu.memory_space<vmem>>) attributes {dimension_semantics = [#tpu.dimension_semantics<parallel>], iteration_bounds = array<i64: 2>, scalar_prefetch = 0 : i64, scratch_operands = 0 : i64, tpu.core_type = #tpu.core_type<tc>, window_params = [{transform_indices = @transform_0, window_bounds = array<i64: 1, 8, 256>}, {transform_indices = @transform_1, window_bounds = array<i64: 1, 8, 64>}, {pipeline_mode = #tpu.pipeline_mode<synchronous>, transform_indices = @transform_2, window_bounds = array<i64: 8, 9>}, {pipeline_mode = #tpu.pipeline_mode<synchronous>, transform_indices = @transform_3, window_bounds = array<i64: 8, 9>}, {pipeline_mode = #tpu.pipeline_mode<synchronous>, transform_indices = @transform_4, window_bounds = array<i64: 64, 256>}, {pipeline_mode = #tpu.pipeline_mode<synchronous>, transform_indices = @transform_5, window_bounds = array<i64: 256, 64>}, {pipeline_mode = #tpu.pipeline_mode<synchronous>, transform_indices = @transform_6, window_bounds = array<i64: 8, 73>}, {pipeline_mode = #tpu.pipeline_mode<synchronous>, transform_indices = @transform_7, window_bounds = array<i64: 8, 8>}, {pipeline_mode = #tpu.pipeline_mode<synchronous>, transform_indices = @transform_8, window_bounds = array<i64: 9, 256>}, {transform_indices = @transform_9, window_bounds = array<i64: 1, 8, 256>}]} {
    %c0 = arith.constant 0 : index
    %c0_0 = arith.constant 0 : index
    %c0_1 = arith.constant 0 : index
    %0 = vector.load %arg1[%c0, %c0_0, %c0_1] : memref<1x8x256xf32, #tpu.memory_space<vmem>>, vector<1x8x256xf32>
    %1 = vector.shape_cast %0 : vector<1x8x256xf32> to vector<8x256xf32>
    %c0_2 = arith.constant 0 : index
    %c0_3 = arith.constant 0 : index
    %c0_4 = arith.constant 0 : index
    %2 = vector.load %arg2[%c0_2, %c0_3, %c0_4] : memref<1x8x64xf32, #tpu.memory_space<vmem>>, vector<1x8x64xf32>
    %3 = vector.shape_cast %2 : vector<1x8x64xf32> to vector<8x64xf32>
    %cst = arith.constant 1.000000e+00 : f32
    %4 = vector.broadcast %cst : f32 to vector<1x256xf32>
    %cst_5 = arith.constant 1.000000e+00 : f32
    %5 = vector.broadcast %cst_5 : f32 to vector<1x64xf32>
    %c0_6 = arith.constant 0 : index
    %c0_7 = arith.constant 0 : index
    %6 = vector.load %arg3[%c0_6, %c0_7] : memref<8x9xf32, #tpu.memory_space<vmem>>, vector<8x9xf32>
    %7 = tpu.concatenate %1, %4 in 0 : vector<8x256xf32>, vector<1x256xf32> -> vector<9x256xf32>
    %cst_8 = arith.constant dense<0.000000e+00> : vector<8x256xf32>
    %8 = tpu.matmul %6, %7, %cst_8 {dimension_numbers = #tpu.dot_dimension_numbers<[1], [0], [0], [1], [0, 0, 1, 1], [], []>} : vector<8x9xf32>, vector<9x256xf32>, vector<8x256xf32> -> vector<8x256xf32>
    %c0_9 = arith.constant 0 : index
    %c0_10 = arith.constant 0 : index
    %9 = vector.load %arg4[%c0_9, %c0_10] : memref<8x9xf32, #tpu.memory_space<vmem>>, vector<8x9xf32>
    %10 = tpu.concatenate %3, %5 in 0 : vector<8x64xf32>, vector<1x64xf32> -> vector<9x64xf32>
    %cst_11 = arith.constant dense<0.000000e+00> : vector<8x64xf32>
    %11 = tpu.matmul %9, %10, %cst_11 {dimension_numbers = #tpu.dot_dimension_numbers<[1], [0], [0], [1], [0, 0, 1, 1], [], []>} : vector<8x9xf32>, vector<9x64xf32>, vector<8x64xf32> -> vector<8x64xf32>
    %12 = vector.extract_strided_slice %8 {offsets = [0, 0], sizes = [4, 256], strides = [1, 1]} : vector<8x256xf32> to vector<4x256xf32>
    %13 = arith.negf %12 : vector<4x256xf32>
    %14 = math.exp %13 : vector<4x256xf32>
    %cst_12 = arith.constant 1.000000e+00 : f32
    %15 = vector.broadcast %cst_12 : f32 to vector<4x256xf32>
    %16 = arith.addf %15, %14 : vector<4x256xf32>
    %17 = arith.divf %15, %16 : vector<4x256xf32>
    %18 = vector.extract_strided_slice %8 {offsets = [4, 0], sizes = [4, 256], strides = [1, 1]} : vector<8x256xf32> to vector<4x256xf32>
    %cst_13 = arith.constant 0.000000e+00 : f32
    %19 = vector.broadcast %cst_13 : f32 to vector<4x256xf32>
    %20 = arith.maximumf %18, %19 : vector<4x256xf32>
    %21 = vector.extract_strided_slice %11 {offsets = [0, 0], sizes = [4, 64], strides = [1, 1]} : vector<8x64xf32> to vector<4x64xf32>
    %22 = arith.negf %21 : vector<4x64xf32>
    %23 = math.exp %22 : vector<4x64xf32>
    %cst_14 = arith.constant 1.000000e+00 : f32
    %24 = vector.broadcast %cst_14 : f32 to vector<4x64xf32>
    %25 = arith.addf %24, %23 : vector<4x64xf32>
    %26 = arith.divf %24, %25 : vector<4x64xf32>
    %27 = vector.extract_strided_slice %11 {offsets = [4, 0], sizes = [4, 64], strides = [1, 1]} : vector<8x64xf32> to vector<4x64xf32>
    %cst_15 = arith.constant 0.000000e+00 : f32
    %28 = vector.broadcast %cst_15 : f32 to vector<4x64xf32>
    %29 = arith.maximumf %27, %28 : vector<4x64xf32>
    %30 = arith.mulf %26, %29 : vector<4x64xf32>
    %c0_16 = arith.constant 0 : index
    %c0_17 = arith.constant 0 : index
    %31 = vector.load %arg5[%c0_16, %c0_17] : memref<64x256xf32, #tpu.memory_space<vmem>>, vector<64x256xf32>
    %cst_18 = arith.constant dense<0.000000e+00> : vector<4x256xf32>
    %32 = tpu.matmul %30, %31, %cst_18 {dimension_numbers = #tpu.dot_dimension_numbers<[1], [0], [0], [1], [0, 0, 1, 1], [], []>} : vector<4x64xf32>, vector<64x256xf32>, vector<4x256xf32> -> vector<4x256xf32>
    %33 = arith.mulf %20, %17 : vector<4x256xf32>
    %34 = arith.addf %20, %33 : vector<4x256xf32>
    %cst_19 = arith.constant 1.000000e+00 : f32
    %35 = vector.broadcast %cst_19 : f32 to vector<4x256xf32>
    %36 = arith.subf %35, %17 : vector<4x256xf32>
    %37 = arith.mulf %36, %32 : vector<4x256xf32>
    %38 = arith.addf %34, %37 : vector<4x256xf32>
    %39 = arith.mulf %17, %38 : vector<4x256xf32>
    %c0_20 = arith.constant 0 : index
    %c0_21 = arith.constant 0 : index
    %40 = vector.load %arg6[%c0_20, %c0_21] : memref<256x64xf32, #tpu.memory_space<vmem>>, vector<256x64xf32>
    %cst_22 = arith.constant dense<0.000000e+00> : vector<4x64xf32>
    %41 = tpu.matmul %39, %40, %cst_22 {dimension_numbers = #tpu.dot_dimension_numbers<[1], [0], [0], [1], [0, 0, 1, 1], [], []>} : vector<4x256xf32>, vector<256x64xf32>, vector<4x64xf32> -> vector<4x64xf32>
    %42 = arith.mulf %29, %26 : vector<4x64xf32>
    %43 = arith.addf %29, %42 : vector<4x64xf32>
    %cst_23 = arith.constant 1.000000e+00 : f32
    %44 = vector.broadcast %cst_23 : f32 to vector<4x64xf32>
    %45 = arith.subf %44, %26 : vector<4x64xf32>
    %46 = arith.mulf %45, %41 : vector<4x64xf32>
    %47 = arith.addf %43, %46 : vector<4x64xf32>
    %c0_24 = arith.constant 0 : index
    %c0_25 = arith.constant 0 : index
    %48 = vector.load %arg5[%c0_24, %c0_25] : memref<64x256xf32, #tpu.memory_space<vmem>>, vector<64x256xf32>
    %cst_26 = arith.constant dense<0.000000e+00> : vector<4x256xf32>
    %49 = tpu.matmul %47, %48, %cst_26 {dimension_numbers = #tpu.dot_dimension_numbers<[1], [0], [0], [1], [0, 0, 1, 1], [], []>} : vector<4x64xf32>, vector<64x256xf32>, vector<4x256xf32> -> vector<4x256xf32>
    %50 = tpu.concatenate %49, %38 in 0 : vector<4x256xf32>, vector<4x256xf32> -> vector<8x256xf32>
    %cst_27 = arith.constant 0.000000e+00 : f32
    %51 = vector.broadcast %cst_27 : f32 to vector<8x17xf32>
    %52 = tpu.concatenate %51, %50, %51 in 1 : vector<8x17xf32>, vector<8x256xf32>, vector<8x17xf32> -> vector<8x290xf32>
    %c0_28 = arith.constant 0 : index
    %c0_29 = arith.constant 0 : index
    %53 = vector.load %arg9[%c0_28, %c0_29] : memref<9x256xf32, #tpu.memory_space<vmem>>, vector<9x256xf32>
    %54 = vector.extract_strided_slice %52 {offsets = [0, 0], sizes = [8, 256], strides = [1, 1]} : vector<8x290xf32> to vector<8x256xf32>
    %55 = vector.extract_strided_slice %53 {offsets = [0, 0], sizes = [1, 256], strides = [1, 1]} : vector<9x256xf32> to vector<1x256xf32>
    %56 = vector.broadcast %55 : vector<1x256xf32> to vector<8x256xf32>
    %57 = arith.mulf %54, %56 : vector<8x256xf32>
    %58 = vector.extract_strided_slice %52 {offsets = [0, 1], sizes = [8, 256], strides = [1, 1]} : vector<8x290xf32> to vector<8x256xf32>
    %59 = vector.extract_strided_slice %53 {offsets = [1, 0], sizes = [1, 256], strides = [1, 1]} : vector<9x256xf32> to vector<1x256xf32>
    %60 = vector.broadcast %59 : vector<1x256xf32> to vector<8x256xf32>
    %61 = arith.mulf %58, %60 : vector<8x256xf32>
    %62 = vector.extract_strided_slice %52 {offsets = [0, 2], sizes = [8, 256], strides = [1, 1]} : vector<8x290xf32> to vector<8x256xf32>
    %63 = vector.extract_strided_slice %53 {offsets = [2, 0], sizes = [1, 256], strides = [1, 1]} : vector<9x256xf32> to vector<1x256xf32>
    %64 = vector.broadcast %63 : vector<1x256xf32> to vector<8x256xf32>
    %65 = arith.mulf %62, %64 : vector<8x256xf32>
    %66 = vector.extract_strided_slice %52 {offsets = [0, 16], sizes = [8, 256], strides = [1, 1]} : vector<8x290xf32> to vector<8x256xf32>
    %67 = vector.extract_strided_slice %53 {offsets = [3, 0], sizes = [1, 256], strides = [1, 1]} : vector<9x256xf32> to vector<1x256xf32>
    %68 = vector.broadcast %67 : vector<1x256xf32> to vector<8x256xf32>
    %69 = arith.mulf %66, %68 : vector<8x256xf32>
    %70 = vector.extract_strided_slice %52 {offsets = [0, 17], sizes = [8, 256], strides = [1, 1]} : vector<8x290xf32> to vector<8x256xf32>
    %71 = vector.extract_strided_slice %53 {offsets = [4, 0], sizes = [1, 256], strides = [1, 1]} : vector<9x256xf32> to vector<1x256xf32>
    %72 = vector.broadcast %71 : vector<1x256xf32> to vector<8x256xf32>
    %73 = arith.mulf %70, %72 : vector<8x256xf32>
    %74 = vector.extract_strided_slice %52 {offsets = [0, 18], sizes = [8, 256], strides = [1, 1]} : vector<8x290xf32> to vector<8x256xf32>
    %75 = vector.extract_strided_slice %53 {offsets = [5, 0], sizes = [1, 256], strides = [1, 1]} : vector<9x256xf32> to vector<1x256xf32>
    %76 = vector.broadcast %75 : vector<1x256xf32> to vector<8x256xf32>
    %77 = arith.mulf %74, %76 : vector<8x256xf32>
    %78 = vector.extract_strided_slice %52 {offsets = [0, 32], sizes = [8, 256], strides = [1, 1]} : vector<8x290xf32> to vector<8x256xf32>
    %79 = vector.extract_strided_slice %53 {offsets = [6, 0], sizes = [1, 256], strides = [1, 1]} : vector<9x256xf32> to vector<1x256xf32>
    %80 = vector.broadcast %79 : vector<1x256xf32> to vector<8x256xf32>
    %81 = arith.mulf %78, %80 : vector<8x256xf32>
    %82 = vector.extract_strided_slice %52 {offsets = [0, 33], sizes = [8, 256], strides = [1, 1]} : vector<8x290xf32> to vector<8x256xf32>
    %83 = vector.extract_strided_slice %53 {offsets = [7, 0], sizes = [1, 256], strides = [1, 1]} : vector<9x256xf32> to vector<1x256xf32>
    %84 = vector.broadcast %83 : vector<1x256xf32> to vector<8x256xf32>
    %85 = arith.mulf %82, %84 : vector<8x256xf32>
    %86 = vector.extract_strided_slice %52 {offsets = [0, 34], sizes = [8, 256], strides = [1, 1]} : vector<8x290xf32> to vector<8x256xf32>
    %87 = vector.extract_strided_slice %53 {offsets = [8, 0], sizes = [1, 256], strides = [1, 1]} : vector<9x256xf32> to vector<1x256xf32>
    %88 = vector.broadcast %87 : vector<1x256xf32> to vector<8x256xf32>
    %89 = arith.mulf %86, %88 : vector<8x256xf32>
    %90 = tpu.concatenate %57, %61, %65, %69, %73, %77, %81, %85, %89, %4 in 0 : vector<8x256xf32>, vector<8x256xf32>, vector<8x256xf32>, vector<8x256xf32>, vector<8x256xf32>, vector<8x256xf32>, vector<8x256xf32>, vector<8x256xf32>, vector<8x256xf32>, vector<1x256xf32> -> vector<73x256xf32>
    %c0_30 = arith.constant 0 : index
    %c0_31 = arith.constant 0 : index
    %91 = vector.load %arg7[%c0_30, %c0_31] : memref<8x73xf32, #tpu.memory_space<vmem>>, vector<8x73xf32>
    %cst_32 = arith.constant dense<0.000000e+00> : vector<8x256xf32>
    %92 = tpu.matmul %91, %90, %cst_32 {dimension_numbers = #tpu.dot_dimension_numbers<[1], [0], [0], [1], [0, 0, 1, 1], [], []>} : vector<8x73xf32>, vector<73x256xf32>, vector<8x256xf32> -> vector<8x256xf32>
    %cst_33 = arith.constant 0.000000e+00 : f32
    %93 = vector.broadcast %cst_33 : f32 to vector<8x256xf32>
    %94 = arith.maximumf %92, %93 : vector<8x256xf32>
    %c0_34 = arith.constant 0 : index
    %c0_35 = arith.constant 0 : index
    %95 = vector.load %arg8[%c0_34, %c0_35] : memref<8x8xf32, #tpu.memory_space<vmem>>, vector<8x8xf32>
    %cst_36 = arith.constant dense<0.000000e+00> : vector<8x256xf32>
    %96 = tpu.matmul %95, %94, %cst_36 {dimension_numbers = #tpu.dot_dimension_numbers<[1], [0], [0], [1], [0, 0, 1, 1], [], []>} : vector<8x8xf32>, vector<8x256xf32>, vector<8x256xf32> -> vector<8x256xf32>
    %c0_37 = arith.constant 0 : index
    %c0_38 = arith.constant 0 : index
    %c0_39 = arith.constant 0 : index
    %97 = vector.load %arg10[%c0_37, %c0_38, %c0_39] : memref<1x8x256xf32, #tpu.memory_space<vmem>>, vector<1x8x256xf32>
    %98 = vector.shape_cast %97 : vector<1x8x256xf32> to vector<8x256xf32>
    %99 = vector.shape_cast %96 : vector<8x256xf32> to vector<1x8x256xf32>
    tpu.vector_store %arg10[%c0_37, %c0_38, %c0_39], %99 {strides = array<i32>} : memref<1x8x256xf32, #tpu.memory_space<vmem>>, vector<1x8x256xf32>,
    return
  }
  func.func @transform_0(%arg0: i32) -> (i32, i32, i32) {
    %c0_i32 = arith.constant 0 : i32
    %c0_i32_0 = arith.constant 0 : i32
    %c0_i32_1 = arith.constant 0 : i32
    return %arg0, %c0_i32, %c0_i32_0 : i32, i32, i32
  }
  func.func @transform_1(%arg0: i32) -> (i32, i32, i32) {
    %c0_i32 = arith.constant 0 : i32
    %c0_i32_0 = arith.constant 0 : i32
    %c0_i32_1 = arith.constant 0 : i32
    return %arg0, %c0_i32, %c0_i32_0 : i32, i32, i32
  }
  func.func @transform_2(%arg0: i32) -> (i32, i32) {
    %c0_i32 = arith.constant 0 : i32
    %c0_i32_0 = arith.constant 0 : i32
    %c0_i32_1 = arith.constant 0 : i32
    return %c0_i32, %c0_i32_0 : i32, i32
  }
  func.func @transform_3(%arg0: i32) -> (i32, i32) {
    %c0_i32 = arith.constant 0 : i32
    %c0_i32_0 = arith.constant 0 : i32
    %c0_i32_1 = arith.constant 0 : i32
    return %c0_i32, %c0_i32_0 : i32, i32
  }
  func.func @transform_4(%arg0: i32) -> (i32, i32) {
    %c0_i32 = arith.constant 0 : i32
    %c0_i32_0 = arith.constant 0 : i32
    %c0_i32_1 = arith.constant 0 : i32
    return %c0_i32, %c0_i32_0 : i32, i32
  }
  func.func @transform_5(%arg0: i32) -> (i32, i32) {
    %c0_i32 = arith.constant 0 : i32
    %c0_i32_0 = arith.constant 0 : i32
    %c0_i32_1 = arith.constant 0 : i32
    return %c0_i32, %c0_i32_0 : i32, i32
  }
  func.func @transform_6(%arg0: i32) -> (i32, i32) {
    %c0_i32 = arith.constant 0 : i32
    %c0_i32_0 = arith.constant 0 : i32
    %c0_i32_1 = arith.constant 0 : i32
    return %c0_i32, %c0_i32_0 : i32, i32
  }
  func.func @transform_7(%arg0: i32) -> (i32, i32) {
    %c0_i32 = arith.constant 0 : i32
    %c0_i32_0 = arith.constant 0 : i32
    %c0_i32_1 = arith.constant 0 : i32
    return %c0_i32, %c0_i32_0 : i32, i32
  }
  func.func @transform_8(%arg0: i32) -> (i32, i32) {
    %c0_i32 = arith.constant 0 : i32
    %c0_i32_0 = arith.constant 0 : i32
    %c0_i32_1 = arith.constant 0 : i32
    return %c0_i32, %c0_i32_0 : i32, i32
  }
  func.func @transform_9(%arg0: i32) -> (i32, i32, i32) {
    %c0_i32 = arith.constant 0 : i32
    %c0_i32_0 = arith.constant 0 : i32
    %c0_i32_1 = arith.constant 0 : i32
    return %arg0, %c0_i32, %c0_i32_0 : i32, i32, i32
  }
}

</mosaic_0001>

<llo_original>
// kernel: sba_forward.1
$region0: #{sba_forward.1}
  #allocation0 [shape = 'u32[]', space=smem, size = 0x4, offset = 0x4, fixed_abs, tag = 'smem constant byte address 0x4 - core index']
  #allocation1 [shape = 'u32[144,128]{1,0:T(1,128)}', space=vmem, size = 0x12000, scoped, tag = 'internal scratch']
  %s0 = inlined_call_operand.vmem [shape: f32[2,8,256], index: 0, kind: input, shape index: {}]
  %s1 = inlined_call_operand.vmem [shape: f32[2,8,64], index: 1, kind: input, shape index: {}]
  %s2 = inlined_call_operand.vmem [shape: f32[8,9], index: 2, kind: input, shape index: {}]
  %s3 = inlined_call_operand.vmem [shape: f32[8,9], index: 3, kind: input, shape index: {}]
  %s4 = inlined_call_operand.vmem [shape: f32[64,256], index: 4, kind: input, shape index: {}]
  %s5 = inlined_call_operand.vmem [shape: f32[256,64], index: 5, kind: input, shape index: {}]
  %s6 = inlined_call_operand.vmem [shape: f32[8,73], index: 6, kind: input, shape index: {}]
  %s7 = inlined_call_operand.vmem [shape: f32[8,8], index: 7, kind: input, shape index: {}]
  %s8 = inlined_call_operand.vmem [shape: f32[9,256], index: 8, kind: input, shape index: {}]
  %s9 = inlined_call_operand.vmem [shape: f32[2,8,256], index: 9, kind: output, shape index: {}]
  %s10 = sld [smem:[#allocation0]]
  $region69: #{sba_forward.1} parent=0
    _
  %s12 = ssub.s32 1, %s10
  %s13 = scalar_select 0, %s12, %s10
  loop: start=0, step=1, limit=4
  $region2: #{sba_forward.1} parent=0 // loop_pre_header
    _
  $region3: #{sba_forward.1} parent=0 // loop_header
    %s15 = sphi 0, %s19
    %p16 = scmp.ge.s32.totalorder %s15, 4
    %s25 = sphi 0, %s27
    %s28 = sphi 0, %s25
    %s29 = sphi 0, %s28
    %s45 = sphi 0, %s29
    %s51 = sphi 0, %s53
    %s54 = sphi 0, %s51
    %s55 = sphi 0, %s54
    %s71 = sphi 0, %s55
    %s75 = sphi 0, %s75
    %s77 = sphi 0, %s75
    %s78 = sphi 0, %s77
    %s92 = sphi 0, %s78
    %s96 = sphi 0, %s96
    %s98 = sphi 0, %s96
    %s99 = sphi 0, %s98
    %s113 = sphi 0, %s99
    %s117 = sphi 0, %s117
    %s119 = sphi 0, %s117
    %s120 = sphi 0, %s119
    %s134 = sphi 0, %s120
    %s138 = sphi 0, %s138
    %s140 = sphi 0, %s138
    %s141 = sphi 0, %s140
    %s155 = sphi 0, %s141
    %s159 = sphi 0, %s159
    %s161 = sphi 0, %s159
    %s162 = sphi 0, %s161
    %s176 = sphi 0, %s162
    %s180 = sphi 0, %s180
    %s182 = sphi 0, %s180
    %s183 = sphi 0, %s182
    %s197 = sphi 0, %s183
    %s201 = sphi 0, %s201
    %s203 = sphi 0, %s201
    %s204 = sphi 0, %s203
    %s218 = sphi 0, %s204
    %s224 = sphi 0, %s226
    %s227 = sphi 0, %s224
    %s228 = sphi 0, %s227
    %s244 = sphi 0, %s228
  $region4: #{sba_forward.1} parent=0 // loop_header_branch
    %18 = sbr.rel (%p16) target = $region8
  $region5: #{sba_forward.1} parent=0 // loop_body
    %s20 = ssub.s32 %s15, 1
    %s21 = ssub.s32 %s15, 2
    %s22 = sadd.s32 %s15, 1
    %s23 = ssub.s32 %s15, %s22
    %p24 = scmp.eq.s32.totalorder %s23, 0
    %s26 = sadd.s32 %s25, 1
    %s27 = scalar_select %p24, %s25, %s26
    %p30 = pneg %p24
    %p31 = scmp.eq.s32.totalorder %s15, 1
    %p32 = por %p30, %p31
    %p33 = scmp.ne.s32.totalorder %s25, %s28
    %p34 = scmp.eq.s32.totalorder %s15, 0
    %p35 = por %p33, %p34
    %p36 = scmp.ne.s32.totalorder %s25, %s28
    %p37 = scmp.eq.s32.totalorder %s20, 1
    %p38 = por %p36, %p37
    %p39 = scmp.ne.s32.totalorder %s28, %s29
    %p40 = scmp.eq.s32.totalorder %s20, 0
    %p41 = por %p39, %p40
    %p42 = scmp.ne.s32.totalorder %s28, %s29
    %p43 = scmp.eq.s32.totalorder %s21, 1
    %p44 = por %p42, %p43
    %p46 = scmp.ne.s32.totalorder %s29, %s45
    %p47 = scmp.eq.s32.totalorder %s21, 0
    %p48 = por %p46, %p47
    %s49 = ssub.s32 %s15, %s22
    %p50 = scmp.eq.s32.totalorder %s49, 0
    %s52 = sadd.s32 %s51, 1
    %s53 = scalar_select %p50, %s51, %s52
    %p56 = pneg %p50
    %p57 = scmp.eq.s32.totalorder %s15, 1
    %p58 = por %p56, %p57
    %p59 = scmp.ne.s32.totalorder %s51, %s54
    %p60 = scmp.eq.s32.totalorder %s15, 0
    %p61 = por %p59, %p60
    %p62 = scmp.ne.s32.totalorder %s51, %s54
    %p63 = scmp.eq.s32.totalorder %s20, 1
    %p64 = por %p62, %p63
    %p65 = scmp.ne.s32.totalorder %s54, %s55
    %p66 = scmp.eq.s32.totalorder %s20, 0
    %p67 = por %p65, %p66
    %p68 = scmp.ne.s32.totalorder %s54, %s55
    %p69 = scmp.eq.s32.totalorder %s21, 1
    %p70 = por %p68, %p69
    %p72 = scmp.ne.s32.totalorder %s55, %s71
    %p73 = scmp.eq.s32.totalorder %s21, 0
    %p74 = por %p72, %p73
    %s76 = sadd.s32 %s75, 1
    %p79 = scmp.eq.s32.totalorder %s15, 1
    %p80 = scmp.ne.s32.totalorder %s75, %s77
    %p81 = scmp.eq.s32.totalorder %s15, 0
    %p82 = por %p80, %p81
    %p83 = scmp.ne.s32.totalorder %s75, %s77
    %p84 = scmp.eq.s32.totalorder %s20, 1
    %p85 = por %p83, %p84
    %p86 = scmp.ne.s32.totalorder %s77, %s78
    %p87 = scmp.eq.s32.totalorder %s20, 0
    %p88 = por %p86, %p87
    %p89 = scmp.ne.s32.totalorder %s77, %s78
    %p90 = scmp.eq.s32.totalorder %s21, 1
    %p91 = por %p89, %p90
    %p93 = scmp.ne.s32.totalorder %s78, %s92
    %p94 = scmp.eq.s32.totalorder %s21, 0
    %p95 = por %p93, %p94
    %s97 = sadd.s32 %s96, 1
    %p100 = scmp.eq.s32.totalorder %s15, 1
    %p101 = scmp.ne.s32.totalorder %s96, %s98
    %p102 = scmp.eq.s32.totalorder %s15, 0
    %p103 = por %p101, %p102
    %p104 = scmp.ne.s32.totalorder %s96, %s98
    %p105 = scmp.eq.s32.totalorder %s20, 1
    %p106 = por %p104, %p105
    %p107 = scmp.ne.s32.totalorder %s98, %s99
    %p108 = scmp.eq.s32.totalorder %s20, 0
    %p109 = por %p107, %p108
    %p110 = scmp.ne.s32.totalorder %s98, %s99
    %p111 = scmp.eq.s32.totalorder %s21, 1
    %p112 = por %p110, %p111
    %p114 = scmp.ne.s32.totalorder %s99, %s113
    %p115 = scmp.eq.s32.totalorder %s21, 0
    %p116 = por %p114, %p115
    %s118 = sadd.s32 %s117, 1
    %p121 = scmp.eq.s32.totalorder %s15, 1
    %p122 = scmp.ne.s32.totalorder %s117, %s119
    %p123 = scmp.eq.s32.totalorder %s15, 0
    %p124 = por %p122, %p123
    %p125 = scmp.ne.s32.totalorder %s117, %s119
    %p126 = scmp.eq.s32.totalorder %s20, 1
    %p127 = por %p125, %p126
    %p128 = scmp.ne.s32.totalorder %s119, %s120
    %p129 = scmp.eq.s32.totalorder %s20, 0
    %p130 = por %p128, %p129
    %p131 = scmp.ne.s32.totalorder %s119, %s120
    %p132 = scmp.eq.s32.totalorder %s21, 1
    %p133 = por %p131, %p132
    %p135 = scmp.ne.s32.totalorder %s120, %s134
    %p136 = scmp.eq.s32.totalorder %s21, 0
    %p137 = por %p135, %p136
    %s139 = sadd.s32 %s138, 1
    %p142 = scmp.eq.s32.totalorder %s15, 1
    %p143 = scmp.ne.s32.totalorder %s138, %s140
    %p144 = scmp.eq.s32.totalorder %s15, 0
    %p145 = por %p143, %p144
    %p146 = scmp.ne.s32.totalorder %s138, %s140
    %p147 = scmp.eq.s32.totalorder %s20, 1
    %p148 = por %p146, %p147
    %p149 = scmp.ne.s32.totalorder %s140, %s141
    %p150 = scmp.eq.s32.totalorder %s20, 0
    %p151 = por %p149, %p150
    %p152 = scmp.ne.s32.totalorder %s140, %s141
    %p153 = scmp.eq.s32.totalorder %s21, 1
    %p154 = por %p152, %p153
    %p156 = scmp.ne.s32.totalorder %s141, %s155
    %p157 = scmp.eq.s32.totalorder %s21, 0
    %p158 = por %p156, %p157
    %s160 = sadd.s32 %s159, 1
    %p163 = scmp.eq.s32.totalorder %s15, 1
    %p164 = scmp.ne.s32.totalorder %s159, %s161
    %p165 = scmp.eq.s32.totalorder %s15, 0
    %p166 = por %p164, %p165
    %p167 = scmp.ne.s32.totalorder %s159, %s161
    %p168 = scmp.eq.s32.totalorder %s20, 1
    %p169 = por %p167, %p168
    %p170 = scmp.ne.s32.totalorder %s161, %s162
    %p171 = scmp.eq.s32.totalorder %s20, 0
    %p172 = por %p170, %p171
    %p173 = scmp.ne.s32.totalorder %s161, %s162
    %p174 = scmp.eq.s32.totalorder %s21, 1
    %p175 = por %p173, %p174
    %p177 = scmp.ne.s32.totalorder %s162, %s176
    %p178 = scmp.eq.s32.totalorder %s21, 0
    %p179 = por %p177, %p178
    %s181 = sadd.s32 %s180, 1
    %p184 = scmp.eq.s32.totalorder %s15, 1
    %p185 = scmp.ne.s32.totalorder %s180, %s182
    %p186 = scmp.eq.s32.totalorder %s15, 0
    %p187 = por %p185, %p186
    %p188 = scmp.ne.s32.totalorder %s180, %s182
    %p189 = scmp.eq.s32.totalorder %s20, 1
    %p190 = por %p188, %p189
    %p191 = scmp.ne.s32.totalorder %s182, %s183
    %p192 = scmp.eq.s32.totalorder %s20, 0
    %p193 = por %p191, %p192
    %p194 = scmp.ne.s32.totalorder %s182, %s183
    %p195 = scmp.eq.s32.totalorder %s21, 1
    %p196 = por %p194, %p195
    %p198 = scmp.ne.s32.totalorder %s183, %s197
    %p199 = scmp.eq.s32.totalorder %s21, 0
    %p200 = por %p198, %p199
    %s202 = sadd.s32 %s201, 1
    %p205 = scmp.eq.s32.totalorder %s15, 1
    %p206 = scmp.ne.s32.totalorder %s201, %s203
    %p207 = scmp.eq.s32.totalorder %s15, 0
    %p208 = por %p206, %p207
    %p209 = scmp.ne.s32.totalorder %s201, %s203
    %p210 = scmp.eq.s32.totalorder %s20, 1
    %p211 = por %p209, %p210
    %p212 = scmp.ne.s32.totalorder %s203, %s204
    %p213 = scmp.eq.s32.totalorder %s20, 0
    %p214 = por %p212, %p213
    %p215 = scmp.ne.s32.totalorder %s203, %s204
    %p216 = scmp.eq.s32.totalorder %s21, 1
    %p217 = por %p215, %p216
    %p219 = scmp.ne.s32.totalorder %s204, %s218
    %p220 = scmp.eq.s32.totalorder %s21, 0
    %p221 = por %p219, %p220
    %s222 = ssub.s32 %s15, %s22
    %p223 = scmp.eq.s32.totalorder %s222, 0
    %s225 = sadd.s32 %s224, 1
    %s226 = scalar_select %p223, %s224, %s225
    %p229 = pneg %p223
    %p230 = scmp.eq.s32.totalorder %s15, 1
    %p231 = por %p229, %p230
    %p232 = scmp.ne.s32.totalorder %s224, %s227
    %p233 = scmp.eq.s32.totalorder %s15, 0
    %p234 = por %p232, %p233
    %p235 = scmp.ne.s32.totalorder %s224, %s227
    %p236 = scmp.eq.s32.totalorder %s20, 1
    %p237 = por %p235, %p236
    %p238 = scmp.ne.s32.totalorder %s227, %s228
    %p239 = scmp.eq.s32.totalorder %s20, 0
    %p240 = por %p238, %p239
    %p241 = scmp.ne.s32.totalorder %s227, %s228
    %p242 = scmp.eq.s32.totalorder %s21, 1
    %p243 = por %p241, %p242
    %p245 = scmp.ne.s32.totalorder %s228, %s244
    %p246 = scmp.eq.s32.totalorder %s21, 0
    %p247 = por %p245, %p246
    %p248 = scmp.le.s32.totalorder 1, %s15
    %p249 = scmp.lt.s32.totalorder %s15, 3
    %p250 = pnand %p248, %p249
    %p251 = pneg %p250
    // Predicated region
    $region9: #{sba_forward.1} parent=5 // pred_check
      _
    $region10: #{sba_forward.1} parent=5 // pred_check_branch
      %253 = sbr.rel (%p250) target = $region12
    $region11: #{sba_forward.1} parent=5 // pred_region
      %s254 = ssub.s32 %s15, 1
      // Predicated region
      $region13: #{sba_forward.1} parent=11 // pred_check
        %p255 = pneg %p88
      $region14: #{sba_forward.1} parent=11 // pred_check_branch
        %257 = sbr.rel (%p255) target = $region16
      $region15: #{sba_forward.1} parent=11 // pred_region
        _
      $region16: #{sba_forward.1} parent=11 // pred_fallthru
        _
      // Predicated region
      $region17: #{sba_forward.1} parent=11 // pred_check
        %p258 = pneg %p109
      $region18: #{sba_forward.1} parent=11 // pred_check_branch
        %260 = sbr.rel (%p258) target = $region20
      $region19: #{sba_forward.1} parent=11 // pred_region
        _
      $region20: #{sba_forward.1} parent=11 // pred_fallthru
        _
      // Predicated region
      $region21: #{sba_forward.1} parent=11 // pred_check
        %p261 = pneg %p130
      $region22: #{sba_forward.1} parent=11 // pred_check_branch
        %263 = sbr.rel (%p261) target = $region24
      $region23: #{sba_forward.1} parent=11 // pred_region
        _
      $region24: #{sba_forward.1} parent=11 // pred_fallthru
        _
      // Predicated region
      $region25: #{sba_forward.1} parent=11 // pred_check
        %p264 = pneg %p151
      $region26: #{sba_forward.1} parent=11 // pred_check_branch
        %266 = sbr.rel (%p264) target = $region28
      $region27: #{sba_forward.1} parent=11 // pred_region
        _
      $region28: #{sba_forward.1} parent=11 // pred_fallthru
        _
      // Predicated region
      $region29: #{sba_forward.1} parent=11 // pred_check
        %p267 = pneg %p172
      $region30: #{sba_forward.1} parent=11 // pred_check_branch
        %269 = sbr.rel (%p267) target = $region32
      $region31: #{sba_forward.1} parent=11 // pred_region
        _
      $region32: #{sba_forward.1} parent=11 // pred_fallthru
        _
      // Predicated region
      $region33: #{sba_forward.1} parent=11 // pred_check
        %p270 = pneg %p193
      $region34: #{sba_forward.1} parent=11 // pred_check_branch
        %272 = sbr.rel (%p270) target = $region36
      $region35: #{sba_forward.1} parent=11 // pred_region
        _
      $region36: #{sba_forward.1} parent=11 // pred_fallthru
        _
      // Predicated region
      $region37: #{sba_forward.1} parent=11 // pred_check
        %p273 = pneg %p214
      $region38: #{sba_forward.1} parent=11 // pred_check_branch
        %275 = sbr.rel (%p273) target = $region40
      $region39: #{sba_forward.1} parent=11 // pred_region
        _
      $region40: #{sba_forward.1} parent=11 // pred_fallthru
        _
    $region12: #{sba_forward.1} parent=5 // pred_fallthru
      _
    %p276 = scmp.lt.s32.totalorder %s15, 2
    // Predicated region
    $region41: #{sba_forward.1} parent=5 // pred_check
      %p277 = pneg %p276
    $region42: #{sba_forward.1} parent=5 // pred_check_branch
      %279 = sbr.rel (%p277) target = $region44
    $region43: #{sba_forward.1} parent=5 // pred_region
      // Predicated region
      $region45: #{sba_forward.1} parent=43 // pred_check
        %p280 = pneg %p35
      $region46: #{sba_forward.1} parent=43 // pred_check_branch
        %282 = sbr.rel (%p280) target = $region48
      $region47: #{sba_forward.1} parent=43 // pred_region
        %p283 = scmp.lt.s32.totalorder %s15, 1
        %s284 = scalar_select %p283, %s15, 1
        %s285 = smul.addr %s284, 2
        %s286 = smul.addr %s285, 8
        %s287 = scalar_lea.vmem %s0, %s286
      $region48: #{sba_forward.1} parent=43 // pred_fallthru
        _
      // Predicated region
      $region49: #{sba_forward.1} parent=43 // pred_check
        %p288 = pneg %p61
      $region50: #{sba_forward.1} parent=43 // pred_check_branch
        %290 = sbr.rel (%p288) target = $region52
      $region51: #{sba_forward.1} parent=43 // pred_region
        %p291 = scmp.lt.s32.totalorder %s15, 1
        %s292 = scalar_select %p291, %s15, 1
        %s293 = smul.addr %s292, 8
        %s294 = scalar_lea.vmem %s1, %s293
      $region52: #{sba_forward.1} parent=43 // pred_fallthru
        _
    $region44: #{sba_forward.1} parent=5 // pred_fallthru
      _
    %p295 = scmp.le.s32.totalorder 1, %s15
    %p296 = scmp.lt.s32.totalorder %s15, 3
    %p297 = pnand %p295, %p296
    %p298 = pneg %p297
    // Predicated region
    $region53: #{sba_forward.1} parent=5 // pred_check
      _
    $region54: #{sba_forward.1} parent=5 // pred_check_branch
      %300 = sbr.rel (%p297) target = $region56
    $region55: #{sba_forward.1} parent=5 // pred_region
      %s301 = ssub.s32 %s15, 1
      %p302 = scmp.lt.s32.totalorder %s20, 1
      %s303 = scalar_select %p302, %s20, 1
      %s304 = smul.addr %s303, 2
      %s305 = smul.addr %s304, 8
      %s306 = scalar_lea.vmem %s0, %s305
      %p307 = pneg %p41
      %p308 = pneg %p38
      %p309 = scmp.lt.s32.totalorder %s20, 1
      %s310 = scalar_select %p309, %s20, 1
      %s311 = smul.addr %s310, 8
      %s312 = scalar_lea.vmem %s1, %s311
      %p313 = pneg %p67
      %p314 = pneg %p64
      %p315 = pneg %p88
      %p316 = pneg %p85
      %p317 = pneg %p109
      %p318 = pneg %p106
      %p319 = pneg %p130
      %p320 = pneg %p127
      %p321 = pneg %p151
      %p322 = pneg %p148
      %p323 = pneg %p172
      %p324 = pneg %p169
      %p325 = pneg %p193
      %p326 = pneg %p190
      %p327 = pneg %p214
      %p328 = pneg %p211
      %p329 = pneg %p240
      %p330 = pneg %p237
      %p331 = scmp.lt.s32.totalorder %s20, 1
      %s332 = scalar_select %p331, %s20, 1
      %s333 = smul.addr %s332, 2
      %s334 = smul.addr %s333, 8
      %s335 = scalar_lea.vmem %s9, %s334
      %p336 = scmp.lt.s32.totalorder %s20, 1
      %s337 = scalar_select %p336, %s20, 1
      %s338 = smul.addr %s337, 2
      %s339 = smul.addr %s338, 8
      %s340 = scalar_lea.vmem %s0, %s339
      %p341 = scmp.lt.s32.totalorder %s20, 1
      %s342 = scalar_select %p341, %s20, 1
      %s343 = smul.addr %s342, 8
      %s344 = scalar_lea.vmem %s1, %s343
      %p345 = scmp.lt.s32.totalorder %s20, 1
      %s346 = scalar_select %p345, %s20, 1
      %s347 = smul.addr %s346, 2
      %s348 = smul.addr %s347, 8
      %s349 = scalar_lea.vmem %s9, %s348
      %v350 = vld [vmem:[%s340] sm:$0xff]
      %v351 = vld [vmem:[%s340 + $0x8] sm:$0xff]
      %v352 = vld [vmem:[%s344] sm:$0xff]
      %v353 = vld [vmem:[%s2] sm:$0xff]
      %vm354 = vcmask 72704
      %v356 = vsel %vm354, %v353, 0
      %vm358 = vcmask 1040384
      %v360 = vsel %vm358, 1.0, 0
      %362 = vmatprep.subr.mxu0 0.0
      %363 = vmatpush1.msra.mxu0 0.0
      %364 = vmatprep.subr.mxu0 0.0
      %365 = vmatpush1.msra.mxu0 0.0
      %366 = vmatprep.subr.mxu0 0.0
      %367 = vmatpush1.msra.mxu0 0.0
      %368 = vmatprep.subr.mxu0 0.0
      %369 = vmatpush1.msra.mxu0 0.0
      %370 = vmatprep.subr.mxu0 0.0
      %371 = vmatpush1.msra.mxu0 0.0
      %372 = vmatprep.subr.mxu0 0.0
      %373 = vmatpush1.msra.mxu0 0.0
      %374 = vmatprep.subr.mxu0 0.0
      %375 = vmatpush1.msra.mxu0 0.0
      %376 = vmatprep.subr.mxu0 0.0
      %377 = vmatpush1.msra.mxu0 0.0
      %378 = vmatprep.subr.mxu0 0.0
      %379 = vmatpush1.msra.mxu0 0.0
      %380 = vmatprep.subr.mxu0 0.0
      %381 = vmatpush1.msra.mxu0 0.0
      %382 = vmatprep.subr.mxu0 0.0
      %383 = vmatpush1.msra.mxu0 0.0
      %384 = vmatprep.subr.mxu0 0.0
      %385 = vmatpush1.msra.mxu0 0.0
      %386 = vmatprep.subr.mxu0 0.0
      %387 = vmatpush1.msra.mxu0 0.0
      %388 = vmatprep.subr.mxu0 0.0
      %389 = vmatpush1.msra.mxu0 0.0
      %390 = vmatprep.subr.mxu0 %v360
      %391 = vmatpush1.msra.mxu0 %v360
      %392 = vmatprep.subr.mxu0 %v351
      %393 = vmatpush1.msra.mxu0 %v350
      %394 = vmatprep.subr.mxu0 0.0
      %395 = vmatpush2.msra.mxu0 0.0
      %396 = vmatprep.subr.mxu0 0.0
      %397 = vmatpush2.msra.mxu0 0.0
      %398 = vmatprep.subr.mxu0 0.0
      %399 = vmatpush2.msra.mxu0 0.0
      %400 = vmatprep.subr.mxu0 0.0
      %401 = vmatpush2.msra.mxu0 0.0
      %402 = vmatprep.subr.mxu0 0.0
      %403 = vmatpush2.msra.mxu0 0.0
      %404 = vmatprep.subr.mxu0 0.0
      %405 = vmatpush2.msra.mxu0 0.0
      %406 = vmatprep.subr.mxu0 0.0
      %407 = vmatpush2.msra.mxu0 0.0
      %408 = vmatprep.subr.mxu0 0.0
      %409 = vmatpush2.msra.mxu0 0.0
      %410 = vmatprep.subr.mxu0 0.0
      %411 = vmatpush2.msra.mxu0 0.0
      %412 = vmatprep.subr.mxu0 0.0
      %413 = vmatpush2.msra.mxu0 0.0
      %414 = vmatprep.subr.mxu0 0.0
      %415 = vmatpush2.msra.mxu0 0.0
      %416 = vmatprep.subr.mxu0 0.0
      %417 = vmatpush2.msra.mxu0 0.0
      %418 = vmatprep.subr.mxu0 0.0
      %419 = vmatpush2.msra.mxu0 0.0
      %420 = vmatprep.subr.mxu0 0.0
      %421 = vmatpush2.msra.mxu0 0.0
      %422 = vmatprep.subr.mxu0 0.0
      %423 = vmatpush2.msra.mxu0 0.0
      %424 = vmatprep.subr.mxu0 0.0
      %425 = vmatpush2.msra.mxu0 0.0
      %426 = vmatprep.mubr.f32.mxu0 0.0
      %427 = vmatmul.mubr.f32.gmra.mxu0 %v356
      %v428 = vpop.f32.mrf.mxu0
      %v429 = vadd.f32 0.0, %v428
      %v430 = vpop.f32.mrf.mxu0
      %v431 = vadd.f32 0.0, %v430
      %432 = vdwg.mxu0
      %v433 = vld [vmem:[%s3] sm:$0xff]
      %v435 = vsel %vm354, %v433, 0
      %437 = vmatprep.subr.mxu0 0.0
      %438 = vmatpush1.msra.mxu0 0.0
      %439 = vmatprep.subr.mxu0 0.0
      %440 = vmatpush1.msra.mxu0 0.0
      %441 = vmatprep.subr.mxu0 0.0
      %442 = vmatpush1.msra.mxu0 0.0
      %443 = vmatprep.subr.mxu0 0.0
      %444 = vmatpush1.msra.mxu0 0.0
      %445 = vmatprep.subr.mxu0 0.0
      %446 = vmatpush1.msra.mxu0 0.0
      %447 = vmatprep.subr.mxu0 0.0
      %448 = vmatpush1.msra.mxu0 0.0
      %449 = vmatprep.subr.mxu0 0.0
      %450 = vmatpush1.msra.mxu0 0.0
      %451 = vmatprep.subr.mxu0 0.0
      %452 = vmatpush1.msra.mxu0 0.0
      %453 = vmatprep.subr.mxu0 0.0
      %454 = vmatpush1.msra.mxu0 0.0
      %455 = vmatprep.subr.mxu0 0.0
      %456 = vmatpush1.msra.mxu0 0.0
      %457 = vmatprep.subr.mxu0 0.0
      %458 = vmatpush1.msra.mxu0 0.0
      %459 = vmatprep.subr.mxu0 0.0
      %460 = vmatpush1.msra.mxu0 0.0
      %461 = vmatprep.subr.mxu0 0.0
      %462 = vmatpush1.msra.mxu0 0.0
      %463 = vmatprep.subr.mxu0 0.0
      %464 = vmatpush1.msra.mxu0 0.0
      %465 = vmatprep.subr.mxu0 0.0
      %466 = vmatpush1.msra.mxu0 %v360
      %467 = vmatprep.subr.mxu0 0.0
      %468 = vmatpush1.msra.mxu0 %v352
      %469 = vmatprep.subr.mxu0 0.0
      %470 = vmatpush2.msra.mxu0 0.0
      %471 = vmatprep.subr.mxu0 0.0
      %472 = vmatpush2.msra.mxu0 0.0
      %473 = vmatprep.subr.mxu0 0.0
      %474 = vmatpush2.msra.mxu0 0.0
      %475 = vmatprep.subr.mxu0 0.0
      %476 = vmatpush2.msra.mxu0 0.0
      %477 = vmatprep.subr.mxu0 0.0
      %478 = vmatpush2.msra.mxu0 0.0
      %479 = vmatprep.subr.mxu0 0.0
      %480 = vmatpush2.msra.mxu0 0.0
      %481 = vmatprep.subr.mxu0 0.0
      %482 = vmatpush2.msra.mxu0 0.0
      %483 = vmatprep.subr.mxu0 0.0
      %484 = vmatpush2.msra.mxu0 0.0
      %485 = vmatprep.subr.mxu0 0.0
      %486 = vmatpush2.msra.mxu0 0.0
      %487 = vmatprep.subr.mxu0 0.0
      %488 = vmatpush2.msra.mxu0 0.0
      %489 = vmatprep.subr.mxu0 0.0
      %490 = vmatpush2.msra.mxu0 0.0
      %491 = vmatprep.subr.mxu0 0.0
      %492 = vmatpush2.msra.mxu0 0.0
      %493 = vmatprep.subr.mxu0 0.0
      %494 = vmatpush2.msra.mxu0 0.0
      %495 = vmatprep.subr.mxu0 0.0
      %496 = vmatpush2.msra.mxu0 0.0
      %497 = vmatprep.subr.mxu0 0.0
      %498 = vmatpush2.msra.mxu0 0.0
      %499 = vmatprep.subr.mxu0 0.0
      %500 = vmatpush2.msra.mxu0 0.0
      %501 = vmatprep.mubr.f32.mxu0 0.0
      %502 = vmatmul.mubr.f32.gmra.mxu0 %v435
      %v503 = vpop.f32.mrf.mxu0
      %v504 = vadd.f32 0.0, %v503
      %v505 = vpop.f32.mrf.mxu0
      %506 = vdwg.mxu0
      %v507 = vxor.u32 %v429, 2147483648
      %v508 = vxor.u32 %v431, 2147483648
      %v509 = vmul.f32 %v507, 1.442695
      %v510 = vpow.pop %v509
      %v511 = vmul.f32 %v508, 1.442695
      %v512 = vpow.pop %v511
      %v513 = vadd.f32 %v510, 1.0
      %v514 = vadd.f32 %v512, 1.0
      %v515 = vrcp.pop %v513
      %v516 = vmul.f32 1.0, %v515
      %v517 = vrcp.pop %v514
      %v518 = vmul.f32 1.0, %v517
      %v519 = vmax.f32 %v429, 0.0
      %v520 = vmax.f32 %v431, 0.0
      %v521 = vxor.u32 %v504, 2147483648
      %v522 = vmul.f32 %v521, 1.442695
      %v523 = vpow.pop %v522
      %v524 = vadd.f32 %v523, 1.0
      %v525 = vrcp.pop %v524
      %v526 = vmul.f32 1.0, %v525
      %v527 = vmax.f32 %v504, 0.0
      %v529 = vrot.slane %v527, 4
      %v531 = vmul.f32 %v526, %v529
      %v532 = vld [vmem:[%s4] sm:$0xff]
      %v533 = vld [vmem:[%s4 + $0x8] sm:$0xff]
      %v534 = vld [vmem:[%s4 + $0x10] sm:$0xff]
      %v535 = vld [vmem:[%s4 + $0x18] sm:$0xff]
      %v536 = vld [vmem:[%s4 + $0x20] sm:$0xff]
      %v537 = vld [vmem:[%s4 + $0x28] sm:$0xff]
      %v538 = vld [vmem:[%s4 + $0x30] sm:$0xff]
      %v539 = vld [vmem:[%s4 + $0x38] sm:$0xff]
      %v540 = vld [vmem:[%s4 + $0x40] sm:$0xff]
      %v541 = vld [vmem:[%s4 + $0x48] sm:$0xff]
      %v542 = vld [vmem:[%s4 + $0x50] sm:$0xff]
      %v543 = vld [vmem:[%s4 + $0x58] sm:$0xff]
      %v544 = vld [vmem:[%s4 + $0x60] sm:$0xff]
      %v545 = vld [vmem:[%s4 + $0x68] sm:$0xff]
      %v546 = vld [vmem:[%s4 + $0x70] sm:$0xff]
      %v547 = vld [vmem:[%s4 + $0x78] sm:$0xff]
      %vm548 = vcmask 523264
      %v550 = vsel %vm548, %v531, 0
      %552 = vmatprep.subr.mxu0 0.0
      %553 = vmatpush1.msra.mxu0 0.0
      %554 = vmatprep.subr.mxu0 0.0
      %555 = vmatpush1.msra.mxu0 0.0
      %556 = vmatprep.subr.mxu0 0.0
      %557 = vmatpush1.msra.mxu0 0.0
      %558 = vmatprep.subr.mxu0 0.0
      %559 = vmatpush1.msra.mxu0 0.0
      %560 = vmatprep.subr.mxu0 0.0
      %561 = vmatpush1.msra.mxu0 0.0
      %562 = vmatprep.subr.mxu0 0.0
      %563 = vmatpush1.msra.mxu0 0.0
      %564 = vmatprep.subr.mxu0 0.0
      %565 = vmatpush1.msra.mxu0 0.0
      %566 = vmatprep.subr.mxu0 0.0
      %567 = vmatpush1.msra.mxu0 0.0
      %568 = vmatprep.subr.mxu0 %v547
      %569 = vmatpush1.msra.mxu0 %v546
      %570 = vmatprep.subr.mxu0 %v545
      %571 = vmatpush1.msra.mxu0 %v544
      %572 = vmatprep.subr.mxu0 %v543
      %573 = vmatpush1.msra.mxu0 %v542
      %574 = vmatprep.subr.mxu0 %v541
      %575 = vmatpush1.msra.mxu0 %v540
      %576 = vmatprep.subr.mxu0 %v539
      %577 = vmatpush1.msra.mxu0 %v538
      %578 = vmatprep.subr.mxu0 %v537
      %579 = vmatpush1.msra.mxu0 %v536
      %580 = vmatprep.subr.mxu0 %v535
      %581 = vmatpush1.msra.mxu0 %v534
      %582 = vmatprep.subr.mxu0 %v533
      %583 = vmatpush1.msra.mxu0 %v532
      %584 = vmatprep.subr.mxu0 0.0
      %585 = vmatpush2.msra.mxu0 0.0
      %586 = vmatprep.subr.mxu0 0.0
      %587 = vmatpush2.msra.mxu0 0.0
      %588 = vmatprep.subr.mxu0 0.0
      %589 = vmatpush2.msra.mxu0 0.0
      %590 = vmatprep.subr.mxu0 0.0
      %591 = vmatpush2.msra.mxu0 0.0
      %592 = vmatprep.subr.mxu0 0.0
      %593 = vmatpush2.msra.mxu0 0.0
      %594 = vmatprep.subr.mxu0 0.0
      %595 = vmatpush2.msra.mxu0 0.0
      %596 = vmatprep.subr.mxu0 0.0
      %597 = vmatpush2.msra.mxu0 0.0
      %598 = vmatprep.subr.mxu0 0.0
      %599 = vmatpush2.msra.mxu0 0.0
      %600 = vmatprep.subr.mxu0 0.0
      %601 = vmatpush2.msra.mxu0 0.0
      %602 = vmatprep.subr.mxu0 0.0
      %603 = vmatpush2.msra.mxu0 0.0
      %604 = vmatprep.subr.mxu0 0.0
      %605 = vmatpush2.msra.mxu0 0.0
      %606 = vmatprep.subr.mxu0 0.0
      %607 = vmatpush2.msra.mxu0 0.0
      %608 = vmatprep.subr.mxu0 0.0
      %609 = vmatpush2.msra.mxu0 0.0
      %610 = vmatprep.subr.mxu0 0.0
      %611 = vmatpush2.msra.mxu0 0.0
      %612 = vmatprep.subr.mxu0 0.0
      %613 = vmatpush2.msra.mxu0 0.0
      %614 = vmatprep.subr.mxu0 0.0
      %615 = vmatpush2.msra.mxu0 0.0
      %616 = vmatprep.mubr.f32.mxu0 0.0
      %617 = vmatmul.mubr.f32.gmra.mxu0 %v550
      %v618 = vpop.f32.mrf.mxu0
      %v619 = vadd.f32 0.0, %v618
      %v620 = vpop.f32.mrf.mxu0
      %v621 = vadd.f32 0.0, %v620
      %622 = vdwg.mxu0
      %v625 = vrot.slane %v516, 4
      %v626 = vrot.slane %v518, 4
      %v629 = vmul.f32 %v519, %v625
      %v630 = vmul.f32 %v520, %v626
      %v631 = vadd.f32 %v519, %v629
      %v632 = vadd.f32 %v520, %v630
      %v633 = vsub.f32 1.0, %v516
      %v634 = vsub.f32 1.0, %v518
      %v635 = vmul.f32 %v633, %v619
      %v636 = vmul.f32 %v634, %v621
      %v639 = vrot.slane %v635, 4
      %v640 = vrot.slane %v636, 4
      %v643 = vadd.f32 %v631, %v639
      %v644 = vadd.f32 %v632, %v640
      %v647 = vrot.slane %v643, 4
      %v648 = vrot.slane %v644, 4
      %v651 = vmul.f32 %v516, %v647
      %v652 = vmul.f32 %v518, %v648
      %v653 = vld [vmem:[%s5] sm:$0xff]
      %v654 = vld [vmem:[%s5 + $0x8] sm:$0xff]
      %v655 = vld [vmem:[%s5 + $0x10] sm:$0xff]
      %v656 = vld [vmem:[%s5 + $0x18] sm:$0xff]
      %v657 = vld [vmem:[%s5 + $0x20] sm:$0xff]
      %v658 = vld [vmem:[%s5 + $0x28] sm:$0xff]
      %v659 = vld [vmem:[%s5 + $0x30] sm:$0xff]
      %v660 = vld [vmem:[%s5 + $0x38] sm:$0xff]
      %v661 = vld [vmem:[%s5 + $0x40] sm:$0xff]
      %v662 = vld [vmem:[%s5 + $0x48] sm:$0xff]
      %v663 = vld [vmem:[%s5 + $0x50] sm:$0xff]
      %v664 = vld [vmem:[%s5 + $0x58] sm:$0xff]
      %v665 = vld [vmem:[%s5 + $0x60] sm:$0xff]
      %v666 = vld [vmem:[%s5 + $0x68] sm:$0xff]
      %v667 = vld [vmem:[%s5 + $0x70] sm:$0xff]
      %v668 = vld [vmem:[%s5 + $0x78] sm:$0xff]
      %v669 = vld [vmem:[%s5 + $0x80] sm:$0xff]
      %v670 = vld [vmem:[%s5 + $0x88] sm:$0xff]
      %v671 = vld [vmem:[%s5 + $0x90] sm:$0xff]
      %v672 = vld [vmem:[%s5 + $0x98] sm:$0xff]
      %v673 = vld [vmem:[%s5 + $0xa0] sm:$0xff]
      %v674 = vld [vmem:[%s5 + $0xa8] sm:$0xff]
      %v675 = vld [vmem:[%s5 + $0xb0] sm:$0xff]
      %v676 = vld [vmem:[%s5 + $0xb8] sm:$0xff]
      %v677 = vld [vmem:[%s5 + $0xc0] sm:$0xff]
      %v678 = vld [vmem:[%s5 + $0xc8] sm:$0xff]
      %v679 = vld [vmem:[%s5 + $0xd0] sm:$0xff]
      %v680 = vld [vmem:[%s5 + $0xd8] sm:$0xff]
      %v681 = vld [vmem:[%s5 + $0xe0] sm:$0xff]
      %v682 = vld [vmem:[%s5 + $0xe8] sm:$0xff]
      %v683 = vld [vmem:[%s5 + $0xf0] sm:$0xff]
      %v684 = vld [vmem:[%s5 + $0xf8] sm:$0xff]
      %685 = vmatprep.subr.mxu0 0.0
      %686 = vmatpush1.msra.mxu0 %v668
      %687 = vmatprep.subr.mxu0 0.0
      %688 = vmatpush1.msra.mxu0 %v667
      %689 = vmatprep.subr.mxu0 0.0
      %690 = vmatpush1.msra.mxu0 %v666
      %691 = vmatprep.subr.mxu0 0.0
      %692 = vmatpush1.msra.mxu0 %v665
      %693 = vmatprep.subr.mxu0 0.0
      %694 = vmatpush1.msra.mxu0 %v664
      %695 = vmatprep.subr.mxu0 0.0
      %696 = vmatpush1.msra.mxu0 %v663
      %697 = vmatprep.subr.mxu0 0.0
      %698 = vmatpush1.msra.mxu0 %v662
      %699 = vmatprep.subr.mxu0 0.0
      %700 = vmatpush1.msra.mxu0 %v661
      %701 = vmatprep.subr.mxu0 0.0
      %702 = vmatpush1.msra.mxu0 %v660
      %703 = vmatprep.subr.mxu0 0.0
      %704 = vmatpush1.msra.mxu0 %v659
      %705 = vmatprep.subr.mxu0 0.0
      %706 = vmatpush1.msra.mxu0 %v658
      %707 = vmatprep.subr.mxu0 0.0
      %708 = vmatpush1.msra.mxu0 %v657
      %709 = vmatprep.subr.mxu0 0.0
      %710 = vmatpush1.msra.mxu0 %v656
      %711 = vmatprep.subr.mxu0 0.0
      %712 = vmatpush1.msra.mxu0 %v655
      %713 = vmatprep.subr.mxu0 0.0
      %714 = vmatpush1.msra.mxu0 %v654
      %715 = vmatprep.subr.mxu0 0.0
      %716 = vmatpush1.msra.mxu0 %v653
      %717 = vmatprep.subr.mxu0 0.0
      %718 = vmatpush2.msra.mxu0 %v684
      %719 = vmatprep.subr.mxu0 0.0
      %720 = vmatpush2.msra.mxu0 %v683
      %721 = vmatprep.subr.mxu0 0.0
      %722 = vmatpush2.msra.mxu0 %v682
      %723 = vmatprep.subr.mxu0 0.0
      %724 = vmatpush2.msra.mxu0 %v681
      %725 = vmatprep.subr.mxu0 0.0
      %726 = vmatpush2.msra.mxu0 %v680
      %727 = vmatprep.subr.mxu0 0.0
      %728 = vmatpush2.msra.mxu0 %v679
      %729 = vmatprep.subr.mxu0 0.0
      %730 = vmatpush2.msra.mxu0 %v678
      %731 = vmatprep.subr.mxu0 0.0
      %732 = vmatpush2.msra.mxu0 %v677
      %733 = vmatprep.subr.mxu0 0.0
      %734 = vmatpush2.msra.mxu0 %v676
      %735 = vmatprep.subr.mxu0 0.0
      %736 = vmatpush2.msra.mxu0 %v675
      %737 = vmatprep.subr.mxu0 0.0
      %738 = vmatpush2.msra.mxu0 %v674
      %739 = vmatprep.subr.mxu0 0.0
      %740 = vmatpush2.msra.mxu0 %v673
      %741 = vmatprep.subr.mxu0 0.0
      %742 = vmatpush2.msra.mxu0 %v672
      %743 = vmatprep.subr.mxu0 0.0
      %744 = vmatpush2.msra.mxu0 %v671
      %745 = vmatprep.subr.mxu0 0.0
      %746 = vmatpush2.msra.mxu0 %v670
      %747 = vmatprep.subr.mxu0 0.0
      %748 = vmatpush2.msra.mxu0 %v669
      %749 = vmatprep.mubr.f32.mxu0 %v652
      %750 = vmatmul.mubr.f32.gmra.mxu0 %v651
      %v751 = vpop.f32.mrf.mxu0
      %v752 = vadd.f32 0.0, %v751
      %v753 = vpop.f32.mrf.mxu0
      %754 = vdwg.mxu0
      %v755 = vrot.slane %v531, 4
      %v757 = vadd.f32 %v527, %v755
      %v758 = vsub.f32 1.0, %v526
      %v759 = vmul.f32 %v758, %v752
      %v761 = vrot.slane %v759, 4
      %v763 = vadd.f32 %v757, %v761
      %v765 = vrot.slane %v763, 4
      %v766 = vsel %vm548, %v765, 0
      %768 = vmatprep.subr.mxu0 0.0
      %769 = vmatpush1.msra.mxu0 0.0
      %770 = vmatprep.subr.mxu0 0.0
      %771 = vmatpush1.msra.mxu0 0.0
      %772 = vmatprep.subr.mxu0 0.0
      %773 = vmatpush1.msra.mxu0 0.0
      %774 = vmatprep.subr.mxu0 0.0
      %775 = vmatpush1.msra.mxu0 0.0
      %776 = vmatprep.subr.mxu0 0.0
      %777 = vmatpush1.msra.mxu0 0.0
      %778 = vmatprep.subr.mxu0 0.0
      %779 = vmatpush1.msra.mxu0 0.0
      %780 = vmatprep.subr.mxu0 0.0
      %781 = vmatpush1.msra.mxu0 0.0
      %782 = vmatprep.subr.mxu0 0.0
      %783 = vmatpush1.msra.mxu0 0.0
      %784 = vmatprep.subr.mxu0 %v547
      %785 = vmatpush1.msra.mxu0 %v546
      %786 = vmatprep.subr.mxu0 %v545
      %787 = vmatpush1.msra.mxu0 %v544
      %788 = vmatprep.subr.mxu0 %v543
      %789 = vmatpush1.msra.mxu0 %v542
      %790 = vmatprep.subr.mxu0 %v541
      %791 = vmatpush1.msra.mxu0 %v540
      %792 = vmatprep.subr.mxu0 %v539
      %793 = vmatpush1.msra.mxu0 %v538
      %794 = vmatprep.subr.mxu0 %v537
      %795 = vmatpush1.msra.mxu0 %v536
      %796 = vmatprep.subr.mxu0 %v535
      %797 = vmatpush1.msra.mxu0 %v534
      %798 = vmatprep.subr.mxu0 %v533
      %799 = vmatpush1.msra.mxu0 %v532
      %800 = vmatprep.subr.mxu0 0.0
      %801 = vmatpush2.msra.mxu0 0.0
      %802 = vmatprep.subr.mxu0 0.0
      %803 = vmatpush2.msra.mxu0 0.0
      %804 = vmatprep.subr.mxu0 0.0
      %805 = vmatpush2.msra.mxu0 0.0
      %806 = vmatprep.subr.mxu0 0.0
      %807 = vmatpush2.msra.mxu0 0.0
      %808 = vmatprep.subr.mxu0 0.0
      %809 = vmatpush2.msra.mxu0 0.0
      %810 = vmatprep.subr.mxu0 0.0
      %811 = vmatpush2.msra.mxu0 0.0
      %812 = vmatprep.subr.mxu0 0.0
      %813 = vmatpush2.msra.mxu0 0.0
      %814 = vmatprep.subr.mxu0 0.0
      %815 = vmatpush2.msra.mxu0 0.0
      %816 = vmatprep.subr.mxu0 0.0
      %817 = vmatpush2.msra.mxu0 0.0
      %818 = vmatprep.subr.mxu0 0.0
      %819 = vmatpush2.msra.mxu0 0.0
      %820 = vmatprep.subr.mxu0 0.0
      %821 = vmatpush2.msra.mxu0 0.0
      %822 = vmatprep.subr.mxu0 0.0
      %823 = vmatpush2.msra.mxu0 0.0
      %824 = vmatprep.subr.mxu0 0.0
      %825 = vmatpush2.msra.mxu0 0.0
      %826 = vmatprep.subr.mxu0 0.0
      %827 = vmatpush2.msra.mxu0 0.0
      %828 = vmatprep.subr.mxu0 0.0
      %829 = vmatpush2.msra.mxu0 0.0
      %830 = vmatprep.subr.mxu0 0.0
      %831 = vmatpush2.msra.mxu0 0.0
      %832 = vmatprep.mubr.f32.mxu0 0.0
      %833 = vmatmul.mubr.f32.gmra.mxu0 %v766
      %v834 = vpop.f32.mrf.mxu0
      %v835 = vadd.f32 0.0, %v834
      %v836 = vpop.f32.mrf.mxu0
      %v837 = vadd.f32 0.0, %v836
      %838 = vdwg.mxu0
      %vm839 = vcmask 1043456
      %v840 = vsel %vm839, %v835, %v643
      %v841 = vsel %vm839, %v837, %v644
      %844 = vrot.lane.b32.xlu0 %v840, 17
      %v845 = vpop.permute.xlu0 %844
      %846 = vrot.lane.b32.xlu0 %v841, 17
      %v847 = vpop.permute.xlu0 %846
      %vm848 = vcmask 138240
      %v849 = vsel %vm848, %v845, %v847
      %v853 = vsel %vm848, 0.0, %v845
      %v854 = vsel %vm848, %v847, 0.0
      %v855 = vld [vmem:[%s8] sm:$0xff]
      %v856 = vld [vmem:[%s8 + $0x8] sm:$0xff]
      %v857 = vld [vmem:[%s8 + $0x10] sm:$0x1]
      %v858 = vld [vmem:[%s8 + $0x18] sm:$0x1]
      %v859 = vlaneseq
      %v860 = vshrl.u32 %v859, 7
      %v861 = vsub.s32 0, %v860
      %v862 = vrot.slane %v855, %v861
      %v863 = vlaneseq
      %v864 = vshrl.u32 %v863, 7
      %v865 = vsub.s32 0, %v864
      %v866 = vrot.slane %v856, %v865
      %v867 = vmul.f32 %v853, %v862
      %v868 = vmul.f32 %v849, %v866
      %v869 = vlaneseq
      %v870 = vshrl.u32 %v869, 7
      %v871 = vsub.s32 1, %v870
      %v872 = vrot.slane %v855, %v871
      %v873 = vlaneseq
      %v874 = vshrl.u32 %v873, 7
      %v875 = vsub.s32 1, %v874
      %v876 = vrot.slane %v856, %v875
      %879 = vrot.lane.b32.xlu0 %v872, 1
      %v880 = vpop.permute.xlu0 %879
      %881 = vrot.lane.b32.xlu0 %v876, 1
      %v882 = vpop.permute.xlu0 %881
      %vm883 = vcmask 7168
      %v884 = vsel %vm883, %v880, %v882
      %v888 = vmul.f32 %v853, %v880
      %v889 = vmul.f32 %v849, %v884
      %v890 = vmul.f32 %v854, %v882
      %v891 = vlaneseq
      %v892 = vshrl.u32 %v891, 7
      %v893 = vsub.s32 2, %v892
      %v894 = vrot.slane %v855, %v893
      %v895 = vlaneseq
      %v896 = vshrl.u32 %v895, 7
      %v897 = vsub.s32 2, %v896
      %v898 = vrot.slane %v856, %v897
      %901 = vrot.lane.b32.xlu0 %v894, 2
      %v902 = vpop.permute.xlu0 %901
      %903 = vrot.lane.b32.xlu0 %v898, 2
      %v904 = vpop.permute.xlu0 %903
      %vm905 = vcmask 15360
      %v906 = vsel %vm905, %v902, %v904
      %v910 = vmul.f32 %v853, %v902
      %v911 = vmul.f32 %v849, %v906
      %v912 = vmul.f32 %v854, %v904
      %v913 = vlaneseq
      %v914 = vshrl.u32 %v913, 7
      %v915 = vsub.s32 3, %v914
      %v916 = vrot.slane %v855, %v915
      %v917 = vlaneseq
      %v918 = vshrl.u32 %v917, 7
      %v919 = vsub.s32 3, %v918
      %v920 = vrot.slane %v856, %v919
      %923 = vrot.lane.b32.xlu0 %v916, 16
      %v924 = vpop.permute.xlu0 %923
      %925 = vrot.lane.b32.xlu0 %v920, 16
      %v926 = vpop.permute.xlu0 %925
      %vm927 = vcmask 130048
      %v928 = vsel %vm927, %v924, %v926
      %v932 = vmul.f32 %v853, %v924
      %v933 = vmul.f32 %v849, %v928
      %v934 = vmul.f32 %v854, %v926
      %v935 = vlaneseq
      %v936 = vshrl.u32 %v935, 7
      %v937 = vsub.s32 4, %v936
      %v938 = vrot.slane %v855, %v937
      %v939 = vlaneseq
      %v940 = vshrl.u32 %v939, 7
      %v941 = vsub.s32 4, %v940
      %v942 = vrot.slane %v856, %v941
      %945 = vrot.lane.b32.xlu0 %v938, 17
      %v946 = vpop.permute.xlu0 %945
      %947 = vrot.lane.b32.xlu0 %v942, 17
      %v948 = vpop.permute.xlu0 %947
      %v949 = vsel %vm848, %v946, %v948
      %v953 = vmul.f32 %v853, %v946
      %v954 = vmul.f32 %v849, %v949
      %v955 = vmul.f32 %v854, %v948
      %v956 = vlaneseq
      %v957 = vshrl.u32 %v956, 7
      %v958 = vsub.s32 5, %v957
      %v959 = vrot.slane %v855, %v958
      %v960 = vlaneseq
      %v961 = vshrl.u32 %v960, 7
      %v962 = vsub.s32 5, %v961
      %v963 = vrot.slane %v856, %v962
      %966 = vrot.lane.b32.xlu0 %v959, 18
      %v967 = vpop.permute.xlu0 %966
      %968 = vrot.lane.b32.xlu0 %v963, 18
      %v969 = vpop.permute.xlu0 %968
      %vm970 = vcmask 146432
      %v971 = vsel %vm970, %v967, %v969
      %v975 = vmul.f32 %v853, %v967
      %v976 = vmul.f32 %v849, %v971
      %v977 = vmul.f32 %v854, %v969
      %v978 = vlaneseq
      %v979 = vshrl.u32 %v978, 7
      %v980 = vsub.s32 6, %v979
      %v981 = vrot.slane %v855, %v980
      %v982 = vlaneseq
      %v983 = vshrl.u32 %v982, 7
      %v984 = vsub.s32 6, %v983
      %v985 = vrot.slane %v856, %v984
      %988 = vrot.lane.b32.xlu0 %v981, 32
      %v989 = vpop.permute.xlu0 %988
      %990 = vrot.lane.b32.xlu0 %v985, 32
      %v991 = vpop.permute.xlu0 %990
      %vm992 = vcmask 261120
      %v993 = vsel %vm992, %v989, %v991
      %v997 = vmul.f32 %v853, %v989
      %v998 = vmul.f32 %v849, %v993
      %v999 = vmul.f32 %v854, %v991
      %v1000 = vlaneseq
      %v1001 = vshrl.u32 %v1000, 7
      %v1002 = vsub.s32 7, %v1001
      %v1003 = vrot.slane %v855, %v1002
      %v1004 = vlaneseq
      %v1005 = vshrl.u32 %v1004, 7
      %v1006 = vsub.s32 7, %v1005
      %v1007 = vrot.slane %v856, %v1006
      %1010 = vrot.lane.b32.xlu0 %v1003, 33
      %v1011 = vpop.permute.xlu0 %1010
      %1012 = vrot.lane.b32.xlu0 %v1007, 33
      %v1013 = vpop.permute.xlu0 %1012
      %vm1014 = vcmask 269312
      %v1015 = vsel %vm1014, %v1011, %v1013
      %v1019 = vmul.f32 %v853, %v1011
      %v1020 = vmul.f32 %v849, %v1015
      %v1021 = vmul.f32 %v854, %v1013
      %v1022 = vlaneseq
      %v1023 = vshrl.u32 %v1022, 7
      %v1024 = vsub.s32 0, %v1023
      %v1025 = vrot.slane %v857, %v1024
      %v1026 = vlaneseq
      %v1027 = vshrl.u32 %v1026, 7
      %v1028 = vsub.s32 0, %v1027
      %v1029 = vrot.slane %v858, %v1028
      %1032 = vrot.lane.b32.xlu0 %v1025, 34
      %v1033 = vpop.permute.xlu0 %1032
      %1034 = vrot.lane.b32.xlu0 %v1029, 34
      %v1035 = vpop.permute.xlu0 %1034
      %vm1036 = vcmask 277504
      %v1037 = vsel %vm1036, %v1033, %v1035
      %v1041 = vmul.f32 %v853, %v1033
      %v1042 = vmul.f32 %v849, %v1037
      %v1043 = vmul.f32 %v854, %v1035
      %1047 = vrot.lane.b32.xlu0 %v888, 127
      %v1048 = vpop.permute.xlu0 %1047
      %1049 = vrot.lane.b32.xlu0 %v889, 127
      %v1050 = vpop.permute.xlu0 %1049
      %1051 = vrot.lane.b32.xlu0 %v890, 127
      %v1052 = vpop.permute.xlu0 %1051
      %vm1053 = vcmask 1039360
      %v1054 = vsel %vm1053, %v1048, %v1050
      %v1055 = vsel %vm1053, %v1050, %v1052
      %1061 = vrot.lane.b32.xlu0 %v910, 126
      %v1062 = vpop.permute.xlu0 %1061
      %1063 = vrot.lane.b32.xlu0 %v911, 126
      %v1064 = vpop.permute.xlu0 %1063
      %1065 = vrot.lane.b32.xlu0 %v912, 126
      %v1066 = vpop.permute.xlu0 %1065
      %vm1067 = vcmask 1031168
      %v1068 = vsel %vm1067, %v1062, %v1064
      %v1069 = vsel %vm1067, %v1064, %v1066
      %1075 = vrot.lane.b32.xlu0 %v932, 112
      %v1076 = vpop.permute.xlu0 %1075
      %1077 = vrot.lane.b32.xlu0 %v933, 112
      %v1078 = vpop.permute.xlu0 %1077
      %1079 = vrot.lane.b32.xlu0 %v934, 112
      %v1080 = vpop.permute.xlu0 %1079
      %vm1081 = vcmask 916480
      %v1082 = vsel %vm1081, %v1076, %v1078
      %v1083 = vsel %vm1081, %v1078, %v1080
      %1089 = vrot.lane.b32.xlu0 %v953, 111
      %v1090 = vpop.permute.xlu0 %1089
      %1091 = vrot.lane.b32.xlu0 %v954, 111
      %v1092 = vpop.permute.xlu0 %1091
      %1093 = vrot.lane.b32.xlu0 %v955, 111
      %v1094 = vpop.permute.xlu0 %1093
      %vm1095 = vcmask 908288
      %v1096 = vsel %vm1095, %v1090, %v1092
      %v1097 = vsel %vm1095, %v1092, %v1094
      %1103 = vrot.lane.b32.xlu0 %v975, 110
      %v1104 = vpop.permute.xlu0 %1103
      %1105 = vrot.lane.b32.xlu0 %v976, 110
      %v1106 = vpop.permute.xlu0 %1105
      %1107 = vrot.lane.b32.xlu0 %v977, 110
      %v1108 = vpop.permute.xlu0 %1107
      %vm1109 = vcmask 900096
      %v1110 = vsel %vm1109, %v1104, %v1106
      %v1111 = vsel %vm1109, %v1106, %v1108
      %1117 = vrot.lane.b32.xlu0 %v997, 96
      %v1118 = vpop.permute.xlu0 %1117
      %1119 = vrot.lane.b32.xlu0 %v998, 96
      %v1120 = vpop.permute.xlu0 %1119
      %1121 = vrot.lane.b32.xlu0 %v999, 96
      %v1122 = vpop.permute.xlu0 %1121
      %vm1123 = vcmask 785408
      %v1124 = vsel %vm1123, %v1118, %v1120
      %v1125 = vsel %vm1123, %v1120, %v1122
      %1131 = vrot.lane.b32.xlu0 %v1019, 95
      %v1132 = vpop.permute.xlu0 %1131
      %1133 = vrot.lane.b32.xlu0 %v1020, 95
      %v1134 = vpop.permute.xlu0 %1133
      %1135 = vrot.lane.b32.xlu0 %v1021, 95
      %v1136 = vpop.permute.xlu0 %1135
      %vm1137 = vcmask 777216
      %v1138 = vsel %vm1137, %v1132, %v1134
      %v1139 = vsel %vm1137, %v1134, %v1136
      %1145 = vrot.lane.b32.xlu0 %v1041, 94
      %v1146 = vpop.permute.xlu0 %1145
      %1147 = vrot.lane.b32.xlu0 %v1042, 94
      %v1148 = vpop.permute.xlu0 %1147
      %1149 = vrot.lane.b32.xlu0 %v1043, 94
      %v1150 = vpop.permute.xlu0 %1149
      %vm1151 = vcmask 769024
      %v1152 = vsel %vm1151, %v1146, %v1148
      %v1153 = vsel %vm1151, %v1148, %v1150
      %v1156 = vld [vmem:[%s6] sm:$0xff]
      %vm1157 = vcmask 596992
      %v1159 = vsel %vm1157, %v1156, 0
      %1161 = vmatprep.subr.mxu0 0.0
      %1162 = vmatpush1.msra.mxu0 0.0
      %1163 = vmatprep.subr.mxu0 0.0
      %1164 = vmatpush1.msra.mxu0 0.0
      %1165 = vmatprep.subr.mxu0 0.0
      %1166 = vmatpush1.msra.mxu0 0.0
      %1167 = vmatprep.subr.mxu0 0.0
      %1168 = vmatpush1.msra.mxu0 0.0
      %1169 = vmatprep.subr.mxu0 0.0
      %1170 = vmatpush1.msra.mxu0 0.0
      %1171 = vmatprep.subr.mxu0 0.0
      %1172 = vmatpush1.msra.mxu0 0.0
      %1173 = vmatprep.subr.mxu0 %v360
      %1174 = vmatpush1.msra.mxu0 %v360
      %1175 = vmatprep.subr.mxu0 %v1153
      %1176 = vmatpush1.msra.mxu0 %v1152
      %1177 = vmatprep.subr.mxu0 %v1139
      %1178 = vmatpush1.msra.mxu0 %v1138
      %1179 = vmatprep.subr.mxu0 %v1125
      %1180 = vmatpush1.msra.mxu0 %v1124
      %1181 = vmatprep.subr.mxu0 %v1111
      %1182 = vmatpush1.msra.mxu0 %v1110
      %1183 = vmatprep.subr.mxu0 %v1097
      %1184 = vmatpush1.msra.mxu0 %v1096
      %1185 = vmatprep.subr.mxu0 %v1083
      %1186 = vmatpush1.msra.mxu0 %v1082
      %1187 = vmatprep.subr.mxu0 %v1069
      %1188 = vmatpush1.msra.mxu0 %v1068
      %1189 = vmatprep.subr.mxu0 %v1055
      %1190 = vmatpush1.msra.mxu0 %v1054
      %1191 = vmatprep.subr.mxu0 %v868
      %1192 = vmatpush1.msra.mxu0 %v867
      %1193 = vmatprep.subr.mxu0 0.0
      %1194 = vmatpush2.msra.mxu0 0.0
      %1195 = vmatprep.subr.mxu0 0.0
      %1196 = vmatpush2.msra.mxu0 0.0
      %1197 = vmatprep.subr.mxu0 0.0
      %1198 = vmatpush2.msra.mxu0 0.0
      %1199 = vmatprep.subr.mxu0 0.0
      %1200 = vmatpush2.msra.mxu0 0.0
      %1201 = vmatprep.subr.mxu0 0.0
      %1202 = vmatpush2.msra.mxu0 0.0
      %1203 = vmatprep.subr.mxu0 0.0
      %1204 = vmatpush2.msra.mxu0 0.0
      %1205 = vmatprep.subr.mxu0 0.0
      %1206 = vmatpush2.msra.mxu0 0.0
      %1207 = vmatprep.subr.mxu0 0.0
      %1208 = vmatpush2.msra.mxu0 0.0
      %1209 = vmatprep.subr.mxu0 0.0
      %1210 = vmatpush2.msra.mxu0 0.0
      %1211 = vmatprep.subr.mxu0 0.0
      %1212 = vmatpush2.msra.mxu0 0.0
      %1213 = vmatprep.subr.mxu0 0.0
      %1214 = vmatpush2.msra.mxu0 0.0
      %1215 = vmatprep.subr.mxu0 0.0
      %1216 = vmatpush2.msra.mxu0 0.0
      %1217 = vmatprep.subr.mxu0 0.0
      %1218 = vmatpush2.msra.mxu0 0.0
      %1219 = vmatprep.subr.mxu0 0.0
      %1220 = vmatpush2.msra.mxu0 0.0
      %1221 = vmatprep.subr.mxu0 0.0
      %1222 = vmatpush2.msra.mxu0 0.0
      %1223 = vmatprep.subr.mxu0 0.0
      %1224 = vmatpush2.msra.mxu0 0.0
      %1225 = vmatprep.mubr.f32.mxu0 0.0
      %1226 = vmatmul.mubr.f32.gmra.mxu0 %v1159
      %v1227 = vpop.f32.mrf.mxu0
      %v1228 = vadd.f32 0.0, %v1227
      %v1229 = vpop.f32.mrf.mxu0
      %v1230 = vadd.f32 0.0, %v1229
      %1231 = vdwg.mxu0
      %v1232 = vmax.f32 %v1228, 0.0
      %v1233 = vmax.f32 %v1230, 0.0
      %v1234 = vld [vmem:[%s7] sm:$0xff]
      %vm1235 = vcmask 64512
      %v1237 = vsel %vm1235, %v1234, 0
      %1239 = vmatprep.subr.mxu0 0.0
      %1240 = vmatpush1.msra.mxu0 0.0
      %1241 = vmatprep.subr.mxu0 0.0
      %1242 = vmatpush1.msra.mxu0 0.0
      %1243 = vmatprep.subr.mxu0 0.0
      %1244 = vmatpush1.msra.mxu0 0.0
      %1245 = vmatprep.subr.mxu0 0.0
      %1246 = vmatpush1.msra.mxu0 0.0
      %1247 = vmatprep.subr.mxu0 0.0
      %1248 = vmatpush1.msra.mxu0 0.0
      %1249 = vmatprep.subr.mxu0 0.0
      %1250 = vmatpush1.msra.mxu0 0.0
      %1251 = vmatprep.subr.mxu0 0.0
      %1252 = vmatpush1.msra.mxu0 0.0
      %1253 = vmatprep.subr.mxu0 0.0
      %1254 = vmatpush1.msra.mxu0 0.0
      %1255 = vmatprep.subr.mxu0 0.0
      %1256 = vmatpush1.msra.mxu0 0.0
      %1257 = vmatprep.subr.mxu0 0.0
      %1258 = vmatpush1.msra.mxu0 0.0
      %1259 = vmatprep.subr.mxu0 0.0
      %1260 = vmatpush1.msra.mxu0 0.0
      %1261 = vmatprep.subr.mxu0 0.0
      %1262 = vmatpush1.msra.mxu0 0.0
      %1263 = vmatprep.subr.mxu0 0.0
      %1264 = vmatpush1.msra.mxu0 0.0
      %1265 = vmatprep.subr.mxu0 0.0
      %1266 = vmatpush1.msra.mxu0 0.0
      %1267 = vmatprep.subr.mxu0 0.0
      %1268 = vmatpush1.msra.mxu0 0.0
      %1269 = vmatprep.subr.mxu0 %v1233
      %1270 = vmatpush1.msra.mxu0 %v1232
      %1271 = vmatprep.subr.mxu0 0.0
      %1272 = vmatpush2.msra.mxu0 0.0
      %1273 = vmatprep.subr.mxu0 0.0
      %1274 = vmatpush2.msra.mxu0 0.0
      %1275 = vmatprep.subr.mxu0 0.0
      %1276 = vmatpush2.msra.mxu0 0.0
      %1277 = vmatprep.subr.mxu0 0.0
      %1278 = vmatpush2.msra.mxu0 0.0
      %1279 = vmatprep.subr.mxu0 0.0
      %1280 = vmatpush2.msra.mxu0 0.0
      %1281 = vmatprep.subr.mxu0 0.0
      %1282 = vmatpush2.msra.mxu0 0.0
      %1283 = vmatprep.subr.mxu0 0.0
      %1284 = vmatpush2.msra.mxu0 0.0
      %1285 = vmatprep.subr.mxu0 0.0
      %1286 = vmatpush2.msra.mxu0 0.0
      %1287 = vmatprep.subr.mxu0 0.0
      %1288 = vmatpush2.msra.mxu0 0.0
      %1289 = vmatprep.subr.mxu0 0.0
      %1290 = vmatpush2.msra.mxu0 0.0
      %1291 = vmatprep.subr.mxu0 0.0
      %1292 = vmatpush2.msra.mxu0 0.0
      %1293 = vmatprep.subr.mxu0 0.0
      %1294 = vmatpush2.msra.mxu0 0.0
      %1295 = vmatprep.subr.mxu0 0.0
      %1296 = vmatpush2.msra.mxu0 0.0
      %1297 = vmatprep.subr.mxu0 0.0
      %1298 = vmatpush2.msra.mxu0 0.0
      %1299 = vmatprep.subr.mxu0 0.0
      %1300 = vmatpush2.msra.mxu0 0.0
      %1301 = vmatprep.subr.mxu0 0.0
      %1302 = vmatpush2.msra.mxu0 0.0
      %1303 = vmatprep.mubr.f32.mxu0 0.0
      %1304 = vmatmul.mubr.f32.gmra.mxu0 %v1237
      %v1305 = vpop.f32.mrf.mxu0
      %v1306 = vadd.f32 0.0, %v1305
      %v1307 = vpop.f32.mrf.mxu0
      %v1308 = vadd.f32 0.0, %v1307
      %1309 = vdwg.mxu0
      %1310 = vst [vmem:[%s349] sm:$0xff] %v1306
      %1311 = vst [vmem:[%s349 + $0x8] sm:$0xff] %v1308
      %p1312 = scmp.lt.s32.totalorder %s20, 1
      %s1313 = scalar_select %p1312, %s20, 1
      %s1314 = smul.addr %s1313, 2
      %s1315 = smul.addr %s1314, 8
      %s1316 = scalar_lea.vmem %s9, %s1315
      // Predicated region
      $region57: #{sba_forward.1} parent=55 // pred_check
        %p1317 = pneg %p237
      $region58: #{sba_forward.1} parent=55 // pred_check_branch
        %1319 = sbr.rel (%p1317) target = $region60
      $region59: #{sba_forward.1} parent=55 // pred_region
        _
      $region60: #{sba_forward.1} parent=55 // pred_fallthru
        _
    $region56: #{sba_forward.1} parent=5 // pred_fallthru
      _
    %p1320 = scmp.le.s32.totalorder 2, %s15
    // Predicated region
    $region61: #{sba_forward.1} parent=5 // pred_check
      %p1321 = pneg %p1320
    $region62: #{sba_forward.1} parent=5 // pred_check_branch
      %1323 = sbr.rel (%p1321) target = $region64
    $region63: #{sba_forward.1} parent=5 // pred_region
      %s1324 = ssub.s32 %s15, 2
      // Predicated region
      $region65: #{sba_forward.1} parent=63 // pred_check
        %p1325 = pneg %p243
      $region66: #{sba_forward.1} parent=63 // pred_check_branch
        %1327 = sbr.rel (%p1325) target = $region68
      $region67: #{sba_forward.1} parent=63 // pred_region
        %p1328 = scmp.lt.s32.totalorder %s21, 1
        %s1329 = scalar_select %p1328, %s21, 1
        %s1330 = smul.addr %s1329, 2
        %s1331 = smul.addr %s1330, 8
        %s1332 = scalar_lea.vmem %s9, %s1331
      $region68: #{sba_forward.1} parent=63 // pred_fallthru
        _
    $region64: #{sba_forward.1} parent=5 // pred_fallthru
      _
  $region6: #{sba_forward.1} parent=0 // loop_footer
    %s19 = sadd.s32 1, %s15
  $region7: #{sba_forward.1} parent=0 // loop_footer_branch
    %14 = sbr.rel target = $region3
  $region8: #{sba_forward.1} parent=0 // loop_exit
    _

</llo_original>
